<compile_context>
chip_gen: v6e
topology: v6e:2x2x1
jax: 0.10.0
libtpu: 0.0.40
codegen_flags: <defaults>
</compile_context>

<pallas_src>
import numpy as np
import jax
import jax.numpy as jnp
from jax import lax
from jax.experimental import pallas as pl
from jax.experimental.pallas import tpu as pltpu


# ----------------------------------------------------------------------------
# Kernel factory
# ----------------------------------------------------------------------------
def _make_kernel(expand_ratio, stride, identity, mxu_dtype):
    f32 = jnp.float32

    def mm(a, b):
        # MXU matmul: operands in mxu_dtype (bf16 default), f32 accumulation.
        return jnp.dot(a.astype(mxu_dtype), b.astype(mxu_dtype),
                       preferred_element_type=f32)

    def depthwise(t, k_ref, s_ref, bias_row):
        # 3x3 depthwise conv + folded BN scale, entirely on the MXU.
        #   u_dh = t @ K_dh        (W shift, taps, W-subsample folded in)
        #   out  = sum_dh S_dh@u_dh (H shift, per-image zero pad across the
        #                            batched block, H-subsample folded in)
        # For stride == 1, S_1 is the identity so its matmul is skipped.
        tq = t.astype(mxu_dtype)
        u0 = mm(tq, k_ref[0, 0])
        u1 = mm(tq, k_ref[0, 1])
        u2 = mm(tq, k_ref[0, 2])
        if stride == 1:
            d = u1 + mm(s_ref[0], u0) + mm(s_ref[2], u2)
        else:
            d = mm(s_ref[0], u0) + mm(s_ref[1], u1) + mm(s_ref[2], u2)
        return jnp.clip(d + bias_row, 0.0, 6.0)

    if expand_ratio != 1:
        # expand 1x1 -> BN1 -> ReLU6 -> dw3x3 -> BN2 -> ReLU6 -> proj 1x1 -> BN3
        def kernel(x_ref, w1_ref, k_ref, w3_ref, b1_ref, b2_ref, b3_ref,
                   s_ref, o_ref):
            x = x_ref[0]                                    # (M, W*Cin)
            t = jnp.clip(mm(x, w1_ref[0]) + b1_ref[0], 0.0, 6.0)
            t = depthwise(t, k_ref, s_ref, b2_ref[0])       # (Mo, Wo*hid)
            y = mm(t, w3_ref[0]) + b3_ref[0]                # (Mo, Wo*oup)
            if identity:
                y = y + x.astype(f32)
            o_ref[0] = y.astype(o_ref.dtype)
        return kernel

    # expand_ratio == 1: dw3x3 -> BN1 -> ReLU6 -> proj 1x1 -> BN2
    def kernel(x_ref, k_ref, w2_ref, b1_ref, b2_ref, s_ref, o_ref):
        x = x_ref[0]                                        # (M, W*hid)
        t = depthwise(x, k_ref, s_ref, b1_ref[0])
        y = mm(t, w2_ref[0]) + b2_ref[0]
        if identity:
            y = y + x.astype(f32)
        o_ref[0] = y.astype(o_ref.dtype)
    return kernel


# ----------------------------------------------------------------------------
# Wrapper
# ----------------------------------------------------------------------------
def inverted_residual_pallas(x, params, *, stride, expand_ratio, identity,
                             hid, oup, mxu_dtype=jnp.bfloat16,
                             act_dtype=jnp.bfloat16, img_block=None,
                             max_block_rows=256):
    """x: (P, N, H, W, Cin) float32; params: raw per-branch weights/BN stats."""
    assert stride in (1, 2)
    P, N, H, W, Cin = x.shape
    Ho = (H + 2 - 3) // stride + 1
    Wo = (W + 2 - 3) // stride + 1
    f32 = jnp.float32
    hp = lax.Precision.HIGHEST

    # ---- image batching factor B: largest divisor of N with B*H <= cap ----
    if img_block is None:
        B = 1
        for b in range(1, N + 1):
            if N % b == 0 and b * H <= max_block_rows:
                B = b
    else:
        assert N % img_block == 0
        B = img_block
    M, Mo = B * H, B * Ho

    # Lane-dense 2-D slab per branch: rows = (image, h), lanes = (w, c).
    x2d = x.reshape(P, N * H, W * Cin).astype(act_dtype)

    # 1x1 convs become block-diagonal matmuls on the (rows, W*C) slab.
    def block_diag(w, nblk):
        Pb, Ci, Co = w.shape
        eye = jnp.eye(nblk, dtype=w.dtype)
        # no contraction in this einsum -> exact
        return jnp.einsum('wk,pio->pwiko', eye, w).reshape(
            Pb, nblk * Ci, nblk * Co)

    # W-direction selector: colsel[dw, w_in, w_out] = 1 iff
    # w_in == w_out*stride + dw - 1 (zero-padded boundaries drop out).
    colsel = np.zeros((3, W, Wo), np.float32)
    for dw in range(3):
        for wo in range(Wo):
            wi = wo * stride + dw - 1
            if 0 <= wi < W:
                colsel[dw, wi, wo] = 1.0
    colsel = jnp.asarray(colsel)

    # H-direction selector (per image), then block-diag over the B images in a
    # block: S[dh, b*Ho+ho, b*H+h] = 1 iff h == ho*stride + dh - 1.
    rows_sel = np.zeros((3, Ho, H), np.float32)
    for dh in range(3):
        for ho in range(Ho):
            h = ho * stride + dh - 1
            if 0 <= h < H:
                rows_sel[dh, ho, h] = 1.0
    S = jnp.einsum('ab,ghk->gahbk', jnp.eye(B, dtype=f32),
                   jnp.asarray(rows_sel)).reshape(3, Mo, M).astype(mxu_dtype)

    eye_hid = jnp.eye(hid, dtype=f32)
    tile_w = lambda v: jnp.tile(v, (1, 1, W))      # (P,1,C) -> (P,1,W*C)
    tile_wo = lambda v: jnp.tile(v, (1, 1, Wo))    # (P,1,C) -> (P,1,Wo*C)

    def make_K(kdw, scale):
        # K[p, dh, w_in*hid + e, wo*hid + c] = kdw[p, 3*dh+dw, c] * scale[p, c]
        # with dw = w_in - wo*stride + 1, delta(e == c).
        taps = (kdw * scale).reshape(P, 3, 3, hid)
        return jnp.einsum('dvo,pgdc,ec->pgveoc', colsel, taps, eye_hid,
                          precision=hp).reshape(
                              P, 3, W * hid, Wo * hid).astype(mxu_dtype)

    if expand_ratio != 1:
        w1, s1, b1, kdw, s2, b2, w3, s3, b3 = params
        w1bd = block_diag(w1 * s1, W).astype(mxu_dtype)     # BN1 scale folded
        K = make_K(kdw, s2)                                 # BN2 scale folded
        w3bd = block_diag(w3 * s3, Wo).astype(mxu_dtype)    # BN3 scale folded
        b1r = tile_w(b1)       # (P, 1, W*hid)   post-expand bias
        b2r = tile_wo(b2)      # (P, 1, Wo*hid)  post-depthwise bias
        b3r = tile_wo(b3)      # (P, 1, Wo*oup)  post-projection bias
        per_branch = [w1bd, K, w3bd, b1r, b2r, b3r]
    else:
        kdw, s1, b1, w2, s2, b2 = params
        K = make_K(kdw, s1)                                 # BN1 scale folded
        w2bd = block_diag(w2 * s2, Wo).astype(mxu_dtype)    # BN2 scale folded
        b1r = tile_wo(b1)      # (P, 1, Wo*hid)  post-depthwise bias
        b2r = tile_wo(b2)      # (P, 1, Wo*oup)  post-projection bias
        per_branch = [K, w2bd, b1r, b2r]

    inputs = [x2d] + per_branch + [S]

    # Block specs: grid (branch, image_block).  Per-branch params re-use block
    # (p, 0, ...); S is shared by all branches.
    in_specs = [pl.BlockSpec((1, M, W * Cin), lambda p, n: (p, n, 0))]
    for a in per_branch:
        nd = a.ndim
        in_specs.append(pl.BlockSpec(
            (1,) + tuple(a.shape[1:]),
            lambda p, n, _nd=nd: (p,) + (0,) * (_nd - 1)))
    in_specs.append(pl.BlockSpec(S.shape, lambda p, n: (0, 0, 0)))

    out_spec = pl.BlockSpec((1, Mo, Wo * oup), lambda p, n: (p, n, 0))

    kernel = _make_kernel(expand_ratio, stride, identity, mxu_dtype)

    y2d = pl.pallas_call(
        kernel,
        out_shape=jax.ShapeDtypeStruct((P, N * Ho, Wo * oup), f32),
        grid_spec=pltpu.PrefetchScalarGridSpec(
            num_scalar_prefetch=0,
            grid=(P, N // B),
            in_specs=in_specs,
            out_specs=out_spec),
        compiler_params=pltpu.CompilerParams(
            dimension_semantics=("parallel", "parallel"),
            vmem_limit_bytes=32 * 1024 * 1024),
    )(*inputs)

    return y2d.reshape(P, N, Ho, Wo, oup)


# ----------------------------------------------------------------------------
# Pure-JAX reference (independent: uses lax.conv for the depthwise stage)
# ----------------------------------------------------------------------------
def reference(x, params, *, stride, expand_ratio, identity):
    P = x.shape[0]
    hp = lax.Precision.HIGHEST
    outs = []
    for i in range(P):
        xi = x[i]
        if expand_ratio != 1:
            w1, s1, b1, kdw, s2, b2, w3, s3, b3 = [p[i] for p in params]
            hid = w1.shape[-1]
            t = jnp.einsum('nhwc,cd->nhwd', xi, w1, precision=hp)
            t = jnp.clip(t * s1[0] + b1[0], 0.0, 6.0)
            t = lax.conv_general_dilated(
                t, kdw.reshape(3, 3, 1, hid), (stride, stride), ((1, 1), (1, 1)),
                dimension_numbers=('NHWC', 'HWIO', 'NHWC'),
                feature_group_count=hid, precision=hp)
            t = jnp.clip(t * s2[0] + b2[0], 0.0, 6.0)
            y = jnp.einsum('nhwc,cd->nhwd', t, w3, precision=hp) * s3[0] + b3[0]
        else:
            kdw, s1, b1, w2, s2, b2 = [p[i] for p in params]
            hid = kdw.shape[-1]
            t = lax.conv_general_dilated(
                xi, kdw.reshape(3, 3, 1, hid), (stride, stride), ((1, 1), (1, 1)),
                dimension_numbers=('NHWC', 'HWIO', 'NHWC'),
                feature_group_count=hid, precision=hp)
            t = jnp.clip(t * s1[0] + b1[0], 0.0, 6.0)
            y = jnp.einsum('nhwc,cd->nhwd', t, w2, precision=hp) * s2[0] + b2[0]
        if identity:
            y = y + xi
        outs.append(y)
    return jnp.stack(outs)


# ----------------------------------------------------------------------------
# Deterministic parameter construction + run
# ----------------------------------------------------------------------------
if __name__ == "__main__":
    P = 2                          # num_parallel
    N, Cin, H, W = 8, 8, 16, 16
    oup = 8
    eps = 1e-5

    key = jax.random.PRNGKey(0)
    keys = iter(jax.random.split(key, 64))

    # PyTorch input is a list of NCHW tensors -> stack + convert to NHWC.
    x_nchw = jax.random.normal(next(keys), (P, N, Cin, H, W), jnp.float32)
    x = jnp.transpose(x_nchw, (0, 1, 3, 4, 2))            # (P, N, H, W, Cin)

    scales = jnp.array([0.7 - 0.1 * i for i in range(P)], jnp.float32)

    def make_fc(D):
        w = 0.1 * jax.random.normal(next(keys), (D, 1), jnp.float32)
        b = 0.1 * jax.random.normal(next(keys), (D,), jnp.float32)
        return w, b

    def apply_fc(w, b):
        # per-branch weights: scale_i * W[:,0] + bias  -> (P, D)
        return scales[:, None] * w[None, :, 0] + b[None, :]

    def make_bn(C):
        gamma = jax.random.uniform(next(keys), (P, C), jnp.float32, 0.5, 1.5)
        beta = 0.1 * jax.random.normal(next(keys), (P, C), jnp.float32)
        mean = 0.1 * jax.random.normal(next(keys), (P, C), jnp.float32)
        var = jax.random.uniform(next(keys), (P, C), jnp.float32, 0.5, 1.5)
        s = gamma * jax.lax.rsqrt(var + eps)
        b = beta - mean * s
        return s.reshape(P, 1, C), b.reshape(P, 1, C)

    # ------------------ params for expand_ratio = 2 ------------------
    expand_ratio = 2
    hid = round(Cin * expand_ratio)                       # 16
    fc1_w, fc1_b = make_fc(hid * Cin)                     # 1x1 expand weights
    fc2_w, fc2_b = make_fc(hid * 9)                       # 3x3 depthwise weights
    fc3_w, fc3_b = make_fc(oup * hid)                     # 1x1 project weights
    w1 = jnp.transpose(apply_fc(fc1_w, fc1_b).reshape(P, hid, Cin), (0, 2, 1))
    kdw = jnp.transpose(apply_fc(fc2_w, fc2_b).reshape(P, hid, 9), (0, 2, 1))
    w3 = jnp.transpose(apply_fc(fc3_w, fc3_b).reshape(P, oup, hid), (0, 2, 1))
    s1, b1 = make_bn(hid)
    s2, b2 = make_bn(hid)
    s3, b3 = make_bn(oup)
    params_e = (w1, s1, b1, kdw, s2, b2, w3, s3, b3)

    # ---- case 1: expand_ratio=2, stride=1 (identity) ----
    identity = (Cin == oup)
    ref_e = reference(x, params_e, stride=1, expand_ratio=2, identity=identity)

    # exact f32 MXU / f32 activation path, small image block (multi-step grid)
    out_f32 = inverted_residual_pallas(
        x, params_e, stride=1, expand_ratio=2, identity=identity,
        hid=hid, oup=oup, mxu_dtype=jnp.float32, act_dtype=jnp.float32,
        img_block=2)
    out_f32 = jax.block_until_ready(out_f32)
    assert out_f32.shape == ref_e.shape
    err = float(jnp.max(jnp.abs(out_f32 - ref_e)))
    assert err < 2e-3, f"f32 expand err={err}"

    # default perf config: bf16 activations + bf16 MXU operands, auto batching
    out_bf16 = inverted_residual_pallas(
        x, params_e, stride=1, expand_ratio=2, identity=identity,
        hid=hid, oup=oup)
    out_bf16 = jax.block_until_ready(out_bf16)
    err_b = float(jnp.max(jnp.abs(out_bf16 - ref_e)))
    assert err_b < 1e-1, f"bf16 expand err={err_b}"

    # ---- case 2: expand_ratio=2, stride=2 (no identity) ----
    ref_s2 = reference(x, params_e, stride=2, expand_ratio=2, identity=False)
    out_s2 = inverted_residual_pallas(
        x, params_e, stride=2, expand_ratio=2, identity=False,
        hid=hid, oup=oup, mxu_dtype=jnp.float32, act_dtype=jnp.float32)
    out_s2 = jax.block_until_ready(out_s2)
    assert out_s2.shape == ref_s2.shape
    err_s2 = float(jnp.max(jnp.abs(out_s2 - ref_s2)))
    assert err_s2 < 2e-3, f"f32 stride2 err={err_s2}"

    # ---- case 3: expand_ratio=1, stride=1 ----
    hid1 = Cin                                            # 8
    g1_w, g1_b = make_fc(hid1 * 9)                        # depthwise weights
    g2_w, g2_b = make_fc(oup * hid1)                      # pointwise weights
    kdw1 = jnp.transpose(apply_fc(g1_w, g1_b).reshape(P, hid1, 9), (0, 2, 1))
    w2 = jnp.transpose(apply_fc(g2_w, g2_b).reshape(P, oup, hid1), (0, 2, 1))
    t1, u1 = make_bn(hid1)
    t2, u2 = make_bn(oup)
    params_1 = (kdw1, t1, u1, w2, t2, u2)
    identity1 = (Cin == oup)

    ref_1 = reference(x, params_1, stride=1, expand_ratio=1, identity=identity1)
    out_1 = inverted_residual_pallas(
        x, params_1, stride=1, expand_ratio=1, identity=identity1,
        hid=hid1, oup=oup, mxu_dtype=jnp.float32, act_dtype=jnp.float32)
    out_1 = jax.block_until_ready(out_1)
    assert out_1.shape == ref_1.shape
    err_1 = float(jnp.max(jnp.abs(out_1 - ref_1)))
    assert err_1 < 2e-3, f"f32 ratio1 err={err_1}"

    print("KERNEL_OK")
</pallas_src>

<mosaic_0001>
module attributes {stable_mosaic.version = 11 : i64} {
  func.func @kernel(%arg0: i32, %arg1: i32, %arg2: memref<1x32x128xf32, #tpu.memory_space<vmem>>, %arg3: memref<1x128x256xf32, #tpu.memory_space<vmem>>, %arg4: memref<1x3x256x256xf32, #tpu.memory_space<vmem>>, %arg5: memref<1x256x128xf32, #tpu.memory_space<vmem>>, %arg6: memref<1x1x256xf32, #tpu.memory_space<vmem>>, %arg7: memref<1x1x256xf32, #tpu.memory_space<vmem>>, %arg8: memref<1x1x128xf32, #tpu.memory_space<vmem>>, %arg9: memref<3x32x32xf32, #tpu.memory_space<vmem>>, %arg10: memref<1x32x128xf32, #tpu.memory_space<vmem>>) attributes {dimension_semantics = [#tpu.dimension_semantics<parallel>, #tpu.dimension_semantics<parallel>], iteration_bounds = array<i64: 2, 4>, scalar_prefetch = 0 : i64, scratch_operands = 0 : i64, tpu.core_type = #tpu.core_type<tc>, window_params = [{transform_indices = @transform_0, window_bounds = array<i64: 1, 32, 128>}, {transform_indices = @transform_1, window_bounds = array<i64: 1, 128, 256>}, {transform_indices = @transform_2, window_bounds = array<i64: 1, 3, 256, 256>}, {transform_indices = @transform_3, window_bounds = array<i64: 1, 256, 128>}, {transform_indices = @transform_4, window_bounds = array<i64: 1, 1, 256>}, {transform_indices = @transform_5, window_bounds = array<i64: 1, 1, 256>}, {transform_indices = @transform_6, window_bounds = array<i64: 1, 1, 128>}, {pipeline_mode = #tpu.pipeline_mode<synchronous>, transform_indices = @transform_7, window_bounds = array<i64: 3, 32, 32>}, {transform_indices = @transform_8, window_bounds = array<i64: 1, 32, 128>}]} {
    %c0 = arith.constant 0 : index
    %c0_0 = arith.constant 0 : index
    %c0_1 = arith.constant 0 : index
    %0 = vector.load %arg2[%c0, %c0_0, %c0_1] : memref<1x32x128xf32, #tpu.memory_space<vmem>>, vector<1x32x128xf32>
    %1 = vector.shape_cast %0 : vector<1x32x128xf32> to vector<32x128xf32>
    %c0_2 = arith.constant 0 : index
    %c0_3 = arith.constant 0 : index
    %c0_4 = arith.constant 0 : index
    %2 = vector.load %arg3[%c0_2, %c0_3, %c0_4] : memref<1x128x256xf32, #tpu.memory_space<vmem>>, vector<1x128x256xf32>
    %3 = vector.shape_cast %2 : vector<1x128x256xf32> to vector<128x256xf32>
    %cst = arith.constant dense<0.000000e+00> : vector<32x256xf32>
    %4 = tpu.matmul %1, %3, %cst {dimension_numbers = #tpu.dot_dimension_numbers<[1], [0], [0], [1], [0, 0, 1, 1], [], []>} : vector<32x128xf32>, vector<128x256xf32>, vector<32x256xf32> -> vector<32x256xf32>
    %c0_5 = arith.constant 0 : index
    %c0_6 = arith.constant 0 : index
    %c0_7 = arith.constant 0 : index
    %5 = vector.load %arg6[%c0_5, %c0_6, %c0_7] : memref<1x1x256xf32, #tpu.memory_space<vmem>>, vector<1x1x256xf32>
    %6 = vector.shape_cast %5 : vector<1x1x256xf32> to vector<1x256xf32>
    %7 = vector.broadcast %6 : vector<1x256xf32> to vector<32x256xf32>
    %8 = arith.addf %4, %7 : vector<32x256xf32>
    %cst_8 = arith.constant 0.000000e+00 : f32
    %cst_9 = arith.constant 6.000000e+00 : f32
    %9 = vector.broadcast %cst_8 : f32 to vector<32x256xf32>
    %10 = arith.maximumf %9, %8 : vector<32x256xf32>
    %11 = vector.broadcast %cst_9 : f32 to vector<32x256xf32>
    %12 = arith.minimumf %11, %10 : vector<32x256xf32>
    %c0_10 = arith.constant 0 : index
    %c0_11 = arith.constant 0 : index
    %c0_12 = arith.constant 0 : index
    %13 = vector.load %arg7[%c0_10, %c0_11, %c0_12] : memref<1x1x256xf32, #tpu.memory_space<vmem>>, vector<1x1x256xf32>
    %14 = vector.shape_cast %13 : vector<1x1x256xf32> to vector<1x256xf32>
    %c0_13 = arith.constant 0 : index
    %c0_14 = arith.constant 0 : index
    %c0_15 = arith.constant 0 : index
    %c0_16 = arith.constant 0 : index
    %15 = vector.load %arg4[%c0_13, %c0_14, %c0_15, %c0_16] : memref<1x3x256x256xf32, #tpu.memory_space<vmem>>, vector<1x1x256x256xf32>
    %16 = vector.shape_cast %15 : vector<1x1x256x256xf32> to vector<256x256xf32>
    %cst_17 = arith.constant dense<0.000000e+00> : vector<32x256xf32>
    %17 = tpu.matmul %12, %16, %cst_17 {dimension_numbers = #tpu.dot_dimension_numbers<[1], [0], [0], [1], [0, 0, 1, 1], [], []>} : vector<32x256xf32>, vector<256x256xf32>, vector<32x256xf32> -> vector<32x256xf32>
    %c0_18 = arith.constant 0 : index
    %c1 = arith.constant 1 : index
    %c0_19 = arith.constant 0 : index
    %c0_20 = arith.constant 0 : index
    %18 = vector.load %arg4[%c0_18, %c1, %c0_19, %c0_20] : memref<1x3x256x256xf32, #tpu.memory_space<vmem>>, vector<1x1x256x256xf32>
    %19 = vector.shape_cast %18 : vector<1x1x256x256xf32> to vector<256x256xf32>
    %cst_21 = arith.constant dense<0.000000e+00> : vector<32x256xf32>
    %20 = tpu.matmul %12, %19, %cst_21 {dimension_numbers = #tpu.dot_dimension_numbers<[1], [0], [0], [1], [0, 0, 1, 1], [], []>} : vector<32x256xf32>, vector<256x256xf32>, vector<32x256xf32> -> vector<32x256xf32>
    %c0_22 = arith.constant 0 : index
    %c2 = arith.constant 2 : index
    %c0_23 = arith.constant 0 : index
    %c0_24 = arith.constant 0 : index
    %21 = vector.load %arg4[%c0_22, %c2, %c0_23, %c0_24] : memref<1x3x256x256xf32, #tpu.memory_space<vmem>>, vector<1x1x256x256xf32>
    %22 = vector.shape_cast %21 : vector<1x1x256x256xf32> to vector<256x256xf32>
    %cst_25 = arith.constant dense<0.000000e+00> : vector<32x256xf32>
    %23 = tpu.matmul %12, %22, %cst_25 {dimension_numbers = #tpu.dot_dimension_numbers<[1], [0], [0], [1], [0, 0, 1, 1], [], []>} : vector<32x256xf32>, vector<256x256xf32>, vector<32x256xf32> -> vector<32x256xf32>
    %c0_26 = arith.constant 0 : index
    %c0_27 = arith.constant 0 : index
    %c0_28 = arith.constant 0 : index
    %24 = vector.load %arg9[%c0_26, %c0_27, %c0_28] : memref<3x32x32xf32, #tpu.memory_space<vmem>>, vector<1x32x32xf32>
    %25 = vector.shape_cast %24 : vector<1x32x32xf32> to vector<32x32xf32>
    %cst_29 = arith.constant dense<0.000000e+00> : vector<32x256xf32>
    %26 = tpu.matmul %25, %17, %cst_29 {dimension_numbers = #tpu.dot_dimension_numbers<[1], [0], [0], [1], [0, 0, 1, 1], [], []>} : vector<32x32xf32>, vector<32x256xf32>, vector<32x256xf32> -> vector<32x256xf32>
    %27 = arith.addf %20, %26 : vector<32x256xf32>
    %c2_30 = arith.constant 2 : index
    %c0_31 = arith.constant 0 : index
    %c0_32 = arith.constant 0 : index
    %28 = vector.load %arg9[%c2_30, %c0_31, %c0_32] : memref<3x32x32xf32, #tpu.memory_space<vmem>>, vector<1x32x32xf32>
    %29 = vector.shape_cast %28 : vector<1x32x32xf32> to vector<32x32xf32>
    %cst_33 = arith.constant dense<0.000000e+00> : vector<32x256xf32>
    %30 = tpu.matmul %29, %23, %cst_33 {dimension_numbers = #tpu.dot_dimension_numbers<[1], [0], [0], [1], [0, 0, 1, 1], [], []>} : vector<32x32xf32>, vector<32x256xf32>, vector<32x256xf32> -> vector<32x256xf32>
    %31 = arith.addf %27, %30 : vector<32x256xf32>
    %32 = vector.broadcast %14 : vector<1x256xf32> to vector<32x256xf32>
    %33 = arith.addf %31, %32 : vector<32x256xf32>
    %cst_34 = arith.constant 0.000000e+00 : f32
    %cst_35 = arith.constant 6.000000e+00 : f32
    %34 = vector.broadcast %cst_34 : f32 to vector<32x256xf32>
    %35 = arith.maximumf %34, %33 : vector<32x256xf32>
    %36 = vector.broadcast %cst_35 : f32 to vector<32x256xf32>
    %37 = arith.minimumf %36, %35 : vector<32x256xf32>
    %c0_36 = arith.constant 0 : index
    %c0_37 = arith.constant 0 : index
    %c0_38 = arith.constant 0 : index
    %38 = vector.load %arg5[%c0_36, %c0_37, %c0_38] : memref<1x256x128xf32, #tpu.memory_space<vmem>>, vector<1x256x128xf32>
    %39 = vector.shape_cast %38 : vector<1x256x128xf32> to vector<256x128xf32>
    %cst_39 = arith.constant dense<0.000000e+00> : vector<32x128xf32>
    %40 = tpu.matmul %37, %39, %cst_39 {dimension_numbers = #tpu.dot_dimension_numbers<[1], [0], [0], [1], [0, 0, 1, 1], [], []>} : vector<32x256xf32>, vector<256x128xf32>, vector<32x128xf32> -> vector<32x128xf32>
    %c0_40 = arith.constant 0 : index
    %c0_41 = arith.constant 0 : index
    %c0_42 = arith.constant 0 : index
    %41 = vector.load %arg8[%c0_40, %c0_41, %c0_42] : memref<1x1x128xf32, #tpu.memory_space<vmem>>, vector<1x1x128xf32>
    %42 = vector.shape_cast %41 : vector<1x1x128xf32> to vector<1x128xf32>
    %43 = vector.broadcast %42 : vector<1x128xf32> to vector<32x128xf32>
    %44 = arith.addf %40, %43 : vector<32x128xf32>
    %45 = arith.addf %44, %1 : vector<32x128xf32>
    %c0_43 = arith.constant 0 : index
    %c0_44 = arith.constant 0 : index
    %c0_45 = arith.constant 0 : index
    %46 = vector.load %arg10[%c0_43, %c0_44, %c0_45] : memref<1x32x128xf32, #tpu.memory_space<vmem>>, vector<1x32x128xf32>
    %47 = vector.shape_cast %46 : vector<1x32x128xf32> to vector<32x128xf32>
    %48 = vector.shape_cast %45 : vector<32x128xf32> to vector<1x32x128xf32>
    tpu.vector_store %arg10[%c0_43, %c0_44, %c0_45], %48 {strides = array<i32>} : memref<1x32x128xf32, #tpu.memory_space<vmem>>, vector<1x32x128xf32>,
    return
  }
  func.func @transform_0(%arg0: i32, %arg1: i32) -> (i32, i32, i32) {
    %c0_i32 = arith.constant 0 : i32
    %c0_i32_0 = arith.constant 0 : i32
    return %arg0, %arg1, %c0_i32 : i32, i32, i32
  }
  func.func @transform_1(%arg0: i32, %arg1: i32) -> (i32, i32, i32) {
    %c0_i32 = arith.constant 0 : i32
    %c0_i32_0 = arith.constant 0 : i32
    %c0_i32_1 = arith.constant 0 : i32
    return %arg0, %c0_i32, %c0_i32_0 : i32, i32, i32
  }
  func.func @transform_2(%arg0: i32, %arg1: i32) -> (i32, i32, i32, i32) {
    %c0_i32 = arith.constant 0 : i32
    %c0_i32_0 = arith.constant 0 : i32
    %c0_i32_1 = arith.constant 0 : i32
    %c0_i32_2 = arith.constant 0 : i32
    return %arg0, %c0_i32, %c0_i32_0, %c0_i32_1 : i32, i32, i32, i32
  }
  func.func @transform_3(%arg0: i32, %arg1: i32) -> (i32, i32, i32) {
    %c0_i32 = arith.constant 0 : i32
    %c0_i32_0 = arith.constant 0 : i32
    %c0_i32_1 = arith.constant 0 : i32
    return %arg0, %c0_i32, %c0_i32_0 : i32, i32, i32
  }
  func.func @transform_4(%arg0: i32, %arg1: i32) -> (i32, i32, i32) {
    %c0_i32 = arith.constant 0 : i32
    %c0_i32_0 = arith.constant 0 : i32
    %c0_i32_1 = arith.constant 0 : i32
    return %arg0, %c0_i32, %c0_i32_0 : i32, i32, i32
  }
  func.func @transform_5(%arg0: i32, %arg1: i32) -> (i32, i32, i32) {
    %c0_i32 = arith.constant 0 : i32
    %c0_i32_0 = arith.constant 0 : i32
    %c0_i32_1 = arith.constant 0 : i32
    return %arg0, %c0_i32, %c0_i32_0 : i32, i32, i32
  }
  func.func @transform_6(%arg0: i32, %arg1: i32) -> (i32, i32, i32) {
    %c0_i32 = arith.constant 0 : i32
    %c0_i32_0 = arith.constant 0 : i32
    %c0_i32_1 = arith.constant 0 : i32
    return %arg0, %c0_i32, %c0_i32_0 : i32, i32, i32
  }
  func.func @transform_7(%arg0: i32, %arg1: i32) -> (i32, i32, i32) {
    %c0_i32 = arith.constant 0 : i32
    %c0_i32_0 = arith.constant 0 : i32
    %c0_i32_1 = arith.constant 0 : i32
    %c0_i32_2 = arith.constant 0 : i32
    return %c0_i32, %c0_i32_0, %c0_i32_1 : i32, i32, i32
  }
  func.func @transform_8(%arg0: i32, %arg1: i32) -> (i32, i32, i32) {
    %c0_i32 = arith.constant 0 : i32
    %c0_i32_0 = arith.constant 0 : i32
    return %arg0, %arg1, %c0_i32 : i32, i32, i32
  }
}

</mosaic_0001>

<llo_original>
// kernel: tpu_custom_call.1
$region0: #{tpu_custom_call.1}
  #allocation0 [shape = 'u32[]', space=smem, size = 0x4, offset = 0x4, fixed_abs, tag = 'smem constant byte address 0x4 - core index']
  #allocation1 [shape = 'u32[144,128]{1,0:T(1,128)}', space=vmem, size = 0x12000, scoped, tag = 'internal scratch']
  %s0 = inlined_call_operand.hbm [shape: f32[2,128,128], index: 0, kind: input, shape index: {}]
  %s1 = inlined_call_operand.hbm [shape: f32[2,128,256], index: 1, kind: input, shape index: {}]
  %s2 = inlined_call_operand.hbm [shape: f32[2,3,256,256], index: 2, kind: input, shape index: {}]
  %s3 = inlined_call_operand.hbm [shape: f32[2,256,128], index: 3, kind: input, shape index: {}]
  %s4 = inlined_call_operand.hbm [shape: f32[2,1,256], index: 4, kind: input, shape index: {}]
  %s5 = inlined_call_operand.hbm [shape: f32[2,1,256], index: 5, kind: input, shape index: {}]
  %s6 = inlined_call_operand.hbm [shape: f32[2,1,128], index: 6, kind: input, shape index: {}]
  %s7 = inlined_call_operand.hbm [shape: f32[3,32,32], index: 7, kind: input, shape index: {}]
  %s8 = inlined_call_operand.hbm [shape: f32[2,128,128], index: 8, kind: output, shape index: {}]
  %s9 = sld [smem:[#allocation0]]
  $region97: #{tpu_custom_call.1} parent=0
    _
  %s11 = ssub.s32 1, %s9
  %s12 = scalar_select 0, %s11, %s9
  $region1: #{tpu_custom_call.1} parent=0
    #allocation2 [shape = 'u8[32768]{0}', space=vmem, size = 0x8000, scoped, tag = 'input window, operand 0']
    #allocation3 [shape = 's32[2]{0}', space=sflag, size = 0x8, scoped, tag = 'scoped memory for tpu_custom_call.1']
    #allocation4 [shape = 's32[2]{0}', space=sflag, size = 0x8, scoped, tag = 'scoped memory for tpu_custom_call.1']
    #allocation5 [shape = 'u8[262144]{0}', space=vmem, size = 0x40000, scoped, tag = 'input window, operand 1']
    #allocation6 [shape = 's32[2]{0}', space=sflag, size = 0x8, scoped, tag = 'scoped memory for tpu_custom_call.1']
    #allocation7 [shape = 'u8[1572864]{0}', space=vmem, size = 0x180000, scoped, tag = 'input window, operand 2']
    #allocation8 [shape = 'u8[262144]{0}', space=vmem, size = 0x40000, scoped, tag = 'input window, operand 3']
    #allocation9 [shape = 's32[2]{0}', space=sflag, size = 0x8, scoped, tag = 'scoped memory for tpu_custom_call.1']
    #allocation10 [shape = 'u8[2048]{0}', space=vmem, size = 0x800, scoped, tag = 'input window, operand 4']
    #allocation11 [shape = 'u8[2048]{0}', space=vmem, size = 0x800, scoped, tag = 'input window, operand 5']
    #allocation12 [shape = 's32[2]{0}', space=sflag, size = 0x8, scoped, tag = 'scoped memory for tpu_custom_call.1']
    #allocation13 [shape = 'u8[1024]{0}', space=vmem, size = 0x400, scoped, tag = 'input window, operand 6']
    #allocation14 [shape = 'u8[49152]{0}', space=vmem, size = 0xc000, scoped, tag = 'input window, operand 7, single buffered']
    #allocation15 [shape = 's32[1]{0}', space=sflag, size = 0x4, scoped, tag = 'scoped memory for tpu_custom_call.1']
    #allocation16 [shape = 'u8[32768]{0}', space=vmem, size = 0x8000, scoped, tag = 'output window, operand 0']
    %13 = vsyncpa [#allocation3], 0
    %s14 = scalar_lea.sflag [#allocation3], 1
    %15 = vsyncpa %s14, 0
    %16 = vsyncpa [#allocation6], 0
    %s17 = scalar_lea.sflag [#allocation6], 1
    %18 = vsyncpa %s17, 0
    %19 = vsyncpa [#allocation9], 0
    %s20 = scalar_lea.sflag [#allocation9], 1
    %21 = vsyncpa %s20, 0
    %22 = vsyncpa [#allocation12], 0
    %s23 = scalar_lea.sflag [#allocation12], 1
    %24 = vsyncpa %s23, 0
    %25 = vsyncpa [#allocation15], 0
    %26 = vsyncpa [#allocation4], 0
    %s27 = scalar_lea.sflag [#allocation4], 1
    %28 = vsyncpa %s27, 0
    loop: start=0, step=1, limit=10
    $region2: #{tpu_custom_call.1} parent=1 // loop_pre_header
      _
    $region3: #{tpu_custom_call.1} parent=1 // loop_header
      %s30 = sphi 0, %s34
      %p31 = scmp.ge.s32.totalorder %s30, 10
      %s37 = sphi 0, %s49
      %s38 = sphi 0, %s45
      %s39 = sphi 0, %s37
      %s40 = sphi 0, %s38
      %s41 = sphi 0, %s39
      %s42 = sphi 0, %s40
      %s54 = sphi 0, %s56
      %s57 = sphi 0, %s54
      %s58 = sphi 0, %s57
      %s74 = sphi 0, %s58
      %s80 = sphi 0, %s82
      %s83 = sphi 0, %s80
      %s84 = sphi 0, %s83
      %s100 = sphi 0, %s84
      %s106 = sphi 0, %s108
      %s109 = sphi 0, %s106
      %s110 = sphi 0, %s109
      %s126 = sphi 0, %s110
      %s132 = sphi 0, %s134
      %s135 = sphi 0, %s132
      %s136 = sphi 0, %s135
      %s152 = sphi 0, %s136
      %s158 = sphi 0, %s160
      %s161 = sphi 0, %s158
      %s162 = sphi 0, %s161
      %s178 = sphi 0, %s162
      %s184 = sphi 0, %s186
      %s187 = sphi 0, %s184
      %s188 = sphi 0, %s187
      %s204 = sphi 0, %s188
      %s210 = sphi 0, %s212
      %s213 = sphi 0, %s210
      %s214 = sphi 0, %s213
      %s230 = sphi 0, %s214
      %s234 = sphi 0, %s234
      %s236 = sphi 0, %s234
      %s237 = sphi 0, %s236
      %s251 = sphi 0, %s237
      %s259 = sphi 0, %s261
      %s262 = sphi 0, %s259
      %s263 = sphi 0, %s262
      %s279 = sphi 0, %s263
    $region4: #{tpu_custom_call.1} parent=1 // loop_header_branch
      %33 = sbr.rel (%p31) target = $region8
    $region5: #{tpu_custom_call.1} parent=1 // loop_body
      %s35 = ssub.s32 %s30, 1
      %s36 = ssub.s32 %s30, 2
      %s43 = sadd.s32 1, %s38
      %p44 = scmp.ge.s32.totalorder %s43, 4
      %s45 = scalar_select %p44, 0, %s43
      %s46 = sadd.s32 1, %s37
      %s47 = scalar_select %p44, %s46, %s37
      %p48 = scmp.ge.s32.totalorder %s47, 2
      %s49 = scalar_select %p48, 0, %s47
      %s50 = ssub.s32 %s37, %s49
      %s51 = ssub.s32 %s38, %s45
      %s52 = sor.u32 %s50, %s51
      %p53 = scmp.eq.s32.totalorder %s52, 0
      %s55 = sadd.s32 %s54, 1
      %s56 = scalar_select %p53, %s54, %s55
      %p59 = pneg %p53
      %p60 = scmp.eq.s32.totalorder %s30, 7
      %p61 = por %p59, %p60
      %p62 = scmp.ne.s32.totalorder %s54, %s57
      %p63 = scmp.eq.s32.totalorder %s30, 0
      %p64 = por %p62, %p63
      %p65 = scmp.ne.s32.totalorder %s54, %s57
      %p66 = scmp.eq.s32.totalorder %s35, 7
      %p67 = por %p65, %p66
      %p68 = scmp.ne.s32.totalorder %s57, %s58
      %p69 = scmp.eq.s32.totalorder %s35, 0
      %p70 = por %p68, %p69
      %p71 = scmp.ne.s32.totalorder %s57, %s58
      %p72 = scmp.eq.s32.totalorder %s36, 7
      %p73 = por %p71, %p72
      %p75 = scmp.ne.s32.totalorder %s58, %s74
      %p76 = scmp.eq.s32.totalorder %s36, 0
      %p77 = por %p75, %p76
      %s78 = ssub.s32 %s37, %s49
      %p79 = scmp.eq.s32.totalorder %s78, 0
      %s81 = sadd.s32 %s80, 1
      %s82 = scalar_select %p79, %s80, %s81
      %p85 = pneg %p79
      %p86 = scmp.eq.s32.totalorder %s30, 7
      %p87 = por %p85, %p86
      %p88 = scmp.ne.s32.totalorder %s80, %s83
      %p89 = scmp.eq.s32.totalorder %s30, 0
      %p90 = por %p88, %p89
      %p91 = scmp.ne.s32.totalorder %s80, %s83
      %p92 = scmp.eq.s32.totalorder %s35, 7
      %p93 = por %p91, %p92
      %p94 = scmp.ne.s32.totalorder %s83, %s84
      %p95 = scmp.eq.s32.totalorder %s35, 0
      %p96 = por %p94, %p95
      %p97 = scmp.ne.s32.totalorder %s83, %s84
      %p98 = scmp.eq.s32.totalorder %s36, 7
      %p99 = por %p97, %p98
      %p101 = scmp.ne.s32.totalorder %s84, %s100
      %p102 = scmp.eq.s32.totalorder %s36, 0
      %p103 = por %p101, %p102
      %s104 = ssub.s32 %s37, %s49
      %p105 = scmp.eq.s32.totalorder %s104, 0
      %s107 = sadd.s32 %s106, 1
      %s108 = scalar_select %p105, %s106, %s107
      %p111 = pneg %p105
      %p112 = scmp.eq.s32.totalorder %s30, 7
      %p113 = por %p111, %p112
      %p114 = scmp.ne.s32.totalorder %s106, %s109
      %p115 = scmp.eq.s32.totalorder %s30, 0
      %p116 = por %p114, %p115
      %p117 = scmp.ne.s32.totalorder %s106, %s109
      %p118 = scmp.eq.s32.totalorder %s35, 7
      %p119 = por %p117, %p118
      %p120 = scmp.ne.s32.totalorder %s109, %s110
      %p121 = scmp.eq.s32.totalorder %s35, 0
      %p122 = por %p120, %p121
      %p123 = scmp.ne.s32.totalorder %s109, %s110
      %p124 = scmp.eq.s32.totalorder %s36, 7
      %p125 = por %p123, %p124
      %p127 = scmp.ne.s32.totalorder %s110, %s126
      %p128 = scmp.eq.s32.totalorder %s36, 0
      %p129 = por %p127, %p128
      %s130 = ssub.s32 %s37, %s49
      %p131 = scmp.eq.s32.totalorder %s130, 0
      %s133 = sadd.s32 %s132, 1
      %s134 = scalar_select %p131, %s132, %s133
      %p137 = pneg %p131
      %p138 = scmp.eq.s32.totalorder %s30, 7
      %p139 = por %p137, %p138
      %p140 = scmp.ne.s32.totalorder %s132, %s135
      %p141 = scmp.eq.s32.totalorder %s30, 0
      %p142 = por %p140, %p141
      %p143 = scmp.ne.s32.totalorder %s132, %s135
      %p144 = scmp.eq.s32.totalorder %s35, 7
      %p145 = por %p143, %p144
      %p146 = scmp.ne.s32.totalorder %s135, %s136
      %p147 = scmp.eq.s32.totalorder %s35, 0
      %p148 = por %p146, %p147
      %p149 = scmp.ne.s32.totalorder %s135, %s136
      %p150 = scmp.eq.s32.totalorder %s36, 7
      %p151 = por %p149, %p150
      %p153 = scmp.ne.s32.totalorder %s136, %s152
      %p154 = scmp.eq.s32.totalorder %s36, 0
      %p155 = por %p153, %p154
      %s156 = ssub.s32 %s37, %s49
      %p157 = scmp.eq.s32.totalorder %s156, 0
      %s159 = sadd.s32 %s158, 1
      %s160 = scalar_select %p157, %s158, %s159
      %p163 = pneg %p157
      %p164 = scmp.eq.s32.totalorder %s30, 7
      %p165 = por %p163, %p164
      %p166 = scmp.ne.s32.totalorder %s158, %s161
      %p167 = scmp.eq.s32.totalorder %s30, 0
      %p168 = por %p166, %p167
      %p169 = scmp.ne.s32.totalorder %s158, %s161
      %p170 = scmp.eq.s32.totalorder %s35, 7
      %p171 = por %p169, %p170
      %p172 = scmp.ne.s32.totalorder %s161, %s162
      %p173 = scmp.eq.s32.totalorder %s35, 0
      %p174 = por %p172, %p173
      %p175 = scmp.ne.s32.totalorder %s161, %s162
      %p176 = scmp.eq.s32.totalorder %s36, 7
      %p177 = por %p175, %p176
      %p179 = scmp.ne.s32.totalorder %s162, %s178
      %p180 = scmp.eq.s32.totalorder %s36, 0
      %p181 = por %p179, %p180
      %s182 = ssub.s32 %s37, %s49
      %p183 = scmp.eq.s32.totalorder %s182, 0
      %s185 = sadd.s32 %s184, 1
      %s186 = scalar_select %p183, %s184, %s185
      %p189 = pneg %p183
      %p190 = scmp.eq.s32.totalorder %s30, 7
      %p191 = por %p189, %p190
      %p192 = scmp.ne.s32.totalorder %s184, %s187
      %p193 = scmp.eq.s32.totalorder %s30, 0
      %p194 = por %p192, %p193
      %p195 = scmp.ne.s32.totalorder %s184, %s187
      %p196 = scmp.eq.s32.totalorder %s35, 7
      %p197 = por %p195, %p196
      %p198 = scmp.ne.s32.totalorder %s187, %s188
      %p199 = scmp.eq.s32.totalorder %s35, 0
      %p200 = por %p198, %p199
      %p201 = scmp.ne.s32.totalorder %s187, %s188
      %p202 = scmp.eq.s32.totalorder %s36, 7
      %p203 = por %p201, %p202
      %p205 = scmp.ne.s32.totalorder %s188, %s204
      %p206 = scmp.eq.s32.totalorder %s36, 0
      %p207 = por %p205, %p206
      %s208 = ssub.s32 %s37, %s49
      %p209 = scmp.eq.s32.totalorder %s208, 0
      %s211 = sadd.s32 %s210, 1
      %s212 = scalar_select %p209, %s210, %s211
      %p215 = pneg %p209
      %p216 = scmp.eq.s32.totalorder %s30, 7
      %p217 = por %p215, %p216
      %p218 = scmp.ne.s32.totalorder %s210, %s213
      %p219 = scmp.eq.s32.totalorder %s30, 0
      %p220 = por %p218, %p219
      %p221 = scmp.ne.s32.totalorder %s210, %s213
      %p222 = scmp.eq.s32.totalorder %s35, 7
      %p223 = por %p221, %p222
      %p224 = scmp.ne.s32.totalorder %s213, %s214
      %p225 = scmp.eq.s32.totalorder %s35, 0
      %p226 = por %p224, %p225
      %p227 = scmp.ne.s32.totalorder %s213, %s214
      %p228 = scmp.eq.s32.totalorder %s36, 7
      %p229 = por %p227, %p228
      %p231 = scmp.ne.s32.totalorder %s214, %s230
      %p232 = scmp.eq.s32.totalorder %s36, 0
      %p233 = por %p231, %p232
      %s235 = sadd.s32 %s234, 1
      %p238 = scmp.eq.s32.totalorder %s30, 7
      %p239 = scmp.ne.s32.totalorder %s234, %s236
      %p240 = scmp.eq.s32.totalorder %s30, 0
      %p241 = por %p239, %p240
      %p242 = scmp.ne.s32.totalorder %s234, %s236
      %p243 = scmp.eq.s32.totalorder %s35, 7
      %p244 = por %p242, %p243
      %p245 = scmp.ne.s32.totalorder %s236, %s237
      %p246 = scmp.eq.s32.totalorder %s35, 0
      %p247 = por %p245, %p246
      %p248 = scmp.ne.s32.totalorder %s236, %s237
      %p249 = scmp.eq.s32.totalorder %s36, 7
      %p250 = por %p248, %p249
      %p252 = scmp.ne.s32.totalorder %s237, %s251
      %p253 = scmp.eq.s32.totalorder %s36, 0
      %p254 = por %p252, %p253
      %s255 = ssub.s32 %s37, %s49
      %s256 = ssub.s32 %s38, %s45
      %s257 = sor.u32 %s255, %s256
      %p258 = scmp.eq.s32.totalorder %s257, 0
      %s260 = sadd.s32 %s259, 1
      %s261 = scalar_select %p258, %s259, %s260
      %p264 = pneg %p258
      %p265 = scmp.eq.s32.totalorder %s30, 7
      %p266 = por %p264, %p265
      %p267 = scmp.ne.s32.totalorder %s259, %s262
      %p268 = scmp.eq.s32.totalorder %s30, 0
      %p269 = por %p267, %p268
      %p270 = scmp.ne.s32.totalorder %s259, %s262
      %p271 = scmp.eq.s32.totalorder %s35, 7
      %p272 = por %p270, %p271
      %p273 = scmp.ne.s32.totalorder %s262, %s263
      %p274 = scmp.eq.s32.totalorder %s35, 0
      %p275 = por %p273, %p274
      %p276 = scmp.ne.s32.totalorder %s262, %s263
      %p277 = scmp.eq.s32.totalorder %s36, 7
      %p278 = por %p276, %p277
      %p280 = scmp.ne.s32.totalorder %s263, %s279
      %p281 = scmp.eq.s32.totalorder %s36, 0
      %p282 = por %p280, %p281
      %p283 = scmp.le.s32.totalorder 1, %s30
      %p284 = scmp.lt.s32.totalorder %s30, 9
      %p285 = pnand %p283, %p284
      %p286 = pneg %p285
      // Predicated region
      $region9: #{tpu_custom_call.1} parent=5 // pred_check
        _
      $region10: #{tpu_custom_call.1} parent=5 // pred_check_branch
        %288 = sbr.rel (%p285) target = $region12
      $region11: #{tpu_custom_call.1} parent=5 // pred_region
        %s289 = ssub.s32 %s30, 1
        // Predicated region
        $region13: #{tpu_custom_call.1} parent=11 // pred_check
          %p290 = pneg %p247
        $region14: #{tpu_custom_call.1} parent=11 // pred_check_branch
          %292 = sbr.rel (%p290) target = $region16
        $region15: #{tpu_custom_call.1} parent=11 // pred_region
          %s294 = ssub.s32 1536, 1536
          %295 = vsyncadd [#allocation15], %s294
          %s296 = sshll.u32 [#allocation14], 4
          %s297 = int_to_ptr.vmem [resolvable:$true] %s296
          %302 = dma.hbm_to_vmem [thread:$0]  %s7, 1536, %s297, [#allocation15], 128, 128, 8
        $region16: #{tpu_custom_call.1} parent=11 // pred_fallthru
          _
      $region12: #{tpu_custom_call.1} parent=5 // pred_fallthru
        _
      %p303 = scmp.lt.s32.totalorder %s30, 8
      // Predicated region
      $region17: #{tpu_custom_call.1} parent=5 // pred_check
        %p304 = pneg %p303
      $region18: #{tpu_custom_call.1} parent=5 // pred_check_branch
        %306 = sbr.rel (%p304) target = $region20
      $region19: #{tpu_custom_call.1} parent=5 // pred_region
        // Predicated region
        $region21: #{tpu_custom_call.1} parent=19 // pred_check
          %p307 = pneg %p64
        $region22: #{tpu_custom_call.1} parent=19 // pred_check_branch
          %309 = sbr.rel (%p307) target = $region24
        $region23: #{tpu_custom_call.1} parent=19 // pred_region
          %s310 = sand.u32 %s54, 1
          %s311 = scalar_lea.sflag [#allocation3], %s310
          %s312 = sand.u32 %s54, 1
          %s313 = smul.addr %s312, 32
          %s314 = scalar_lea.vmem [#allocation2], %s313
          %s315 = smul.u32 4, %s38
          %s317 = ssub.s32 512, 512
          %318 = vsyncadd %s311, %s317
          %s319 = smul.addr %s37, 16
          %s320 = sadd.s32 %s315, %s319
          %s321 = smul.addr %s320, 128
          %s322 = scalar_lea.hbm %s0, %s321
          %s323 = sshll.u32 %s314, 4
          %s324 = int_to_ptr.vmem [resolvable:$true] %s323
          %329 = dma.hbm_to_vmem [thread:$0]  %s322, 512, %s324, %s311, 128, 128, 8
        $region24: #{tpu_custom_call.1} parent=19 // pred_fallthru
          _
        // Predicated region
        $region25: #{tpu_custom_call.1} parent=19 // pred_check
          %p330 = pneg %p90
        $region26: #{tpu_custom_call.1} parent=19 // pred_check_branch
          %332 = sbr.rel (%p330) target = $region28
        $region27: #{tpu_custom_call.1} parent=19 // pred_region
          %s333 = sand.u32 %s30, 1
          %s334 = scalar_lea.sflag [#allocation6], %s333
          %s335 = sand.u32 %s80, 1
          %s336 = smul.addr %s335, 256
          %s337 = scalar_lea.vmem [#allocation5], %s336
          %s339 = ssub.s32 4096, 4096
          %340 = vsyncadd %s334, %s339
          %s341 = smul.addr %s37, 32
          %s342 = smul.addr %s341, 128
          %s343 = scalar_lea.hbm %s1, %s342
          %s344 = sshll.u32 %s337, 4
          %s345 = int_to_ptr.vmem [resolvable:$true] %s344
          %350 = dma.hbm_to_vmem [thread:$0]  %s343, 4096, %s345, %s334, 256, 256, 16
        $region28: #{tpu_custom_call.1} parent=19 // pred_fallthru
          _
        // Predicated region
        $region29: #{tpu_custom_call.1} parent=19 // pred_check
          %p351 = pneg %p116
        $region30: #{tpu_custom_call.1} parent=19 // pred_check_branch
          %353 = sbr.rel (%p351) target = $region32
        $region31: #{tpu_custom_call.1} parent=19 // pred_region
          %s354 = sand.u32 %s30, 1
          %s355 = scalar_lea.sflag [#allocation6], %s354
          %s356 = sand.u32 %s106, 1
          %s357 = smul.addr %s356, 1536
          %s358 = scalar_lea.vmem [#allocation7], %s357
          %s360 = ssub.s32 24576, 24576
          %361 = vsyncadd %s355, %s360
          %s362 = smul.addr %s37, 192
          %s363 = smul.addr %s362, 128
          %s364 = scalar_lea.hbm %s2, %s363
          %s365 = sshll.u32 %s358, 4
          %s366 = int_to_ptr.vmem [resolvable:$true] %s365
          %371 = dma.hbm_to_vmem [thread:$0]  %s364, 24576, %s366, %s355, 256, 256, 16
        $region32: #{tpu_custom_call.1} parent=19 // pred_fallthru
          _
        // Predicated region
        $region33: #{tpu_custom_call.1} parent=19 // pred_check
          %p372 = pneg %p142
        $region34: #{tpu_custom_call.1} parent=19 // pred_check_branch
          %374 = sbr.rel (%p372) target = $region36
        $region35: #{tpu_custom_call.1} parent=19 // pred_region
          %s375 = sand.u32 %s30, 1
          %s376 = scalar_lea.sflag [#allocation9], %s375
          %s377 = sand.u32 %s132, 1
          %s378 = smul.addr %s377, 256
          %s379 = scalar_lea.vmem [#allocation8], %s378
          %s381 = ssub.s32 4096, 4096
          %382 = vsyncadd %s376, %s381
          %s383 = smul.addr %s37, 32
          %s384 = smul.addr %s383, 128
          %s385 = scalar_lea.hbm %s3, %s384
          %s386 = sshll.u32 %s379, 4
          %s387 = int_to_ptr.vmem [resolvable:$true] %s386
          %392 = dma.hbm_to_vmem [thread:$0]  %s385, 4096, %s387, %s376, 128, 128, 8
        $region36: #{tpu_custom_call.1} parent=19 // pred_fallthru
          _
        // Predicated region
        $region37: #{tpu_custom_call.1} parent=19 // pred_check
          %p393 = pneg %p168
        $region38: #{tpu_custom_call.1} parent=19 // pred_check_branch
          %395 = sbr.rel (%p393) target = $region40
        $region39: #{tpu_custom_call.1} parent=19 // pred_region
          %s396 = sand.u32 %s30, 1
          %s397 = scalar_lea.sflag [#allocation9], %s396
          %s398 = sand.u32 %s158, 1
          %s399 = smul.addr %s398, 2
          %s400 = scalar_lea.vmem [#allocation10], %s399
          %s402 = ssub.s32 32, 32
          %403 = vsyncadd %s397, %s402
          %s404 = smul.addr %s37, 2
          %s405 = smul.addr %s404, 16
          %s406 = scalar_lea.hbm %s4, %s405
          %s408 = sshll.u32 %s400, 4
          %s409 = int_to_ptr.vmem [resolvable:$true] %s408
          %411 = dma.hbm_to_vmem [thread:$0]  %s406, 32, %s409, %s397
        $region40: #{tpu_custom_call.1} parent=19 // pred_fallthru
          _
        // Predicated region
        $region41: #{tpu_custom_call.1} parent=19 // pred_check
          %p412 = pneg %p194
        $region42: #{tpu_custom_call.1} parent=19 // pred_check_branch
          %414 = sbr.rel (%p412) target = $region44
        $region43: #{tpu_custom_call.1} parent=19 // pred_region
          %s415 = sand.u32 %s30, 1
          %s416 = scalar_lea.sflag [#allocation12], %s415
          %s417 = sand.u32 %s184, 1
          %s418 = smul.addr %s417, 2
          %s419 = scalar_lea.vmem [#allocation11], %s418
          %s421 = ssub.s32 32, 32
          %422 = vsyncadd %s416, %s421
          %s423 = smul.addr %s37, 2
          %s424 = smul.addr %s423, 16
          %s425 = scalar_lea.hbm %s5, %s424
          %s427 = sshll.u32 %s419, 4
          %s428 = int_to_ptr.vmem [resolvable:$true] %s427
          %430 = dma.hbm_to_vmem [thread:$0]  %s425, 32, %s428, %s416
        $region44: #{tpu_custom_call.1} parent=19 // pred_fallthru
          _
        // Predicated region
        $region45: #{tpu_custom_call.1} parent=19 // pred_check
          %p431 = pneg %p220
        $region46: #{tpu_custom_call.1} parent=19 // pred_check_branch
          %433 = sbr.rel (%p431) target = $region48
        $region47: #{tpu_custom_call.1} parent=19 // pred_region
          %s434 = sand.u32 %s30, 1
          %s435 = scalar_lea.sflag [#allocation12], %s434
          %s436 = sand.u32 %s210, 1
          %s437 = scalar_lea.vmem [#allocation13], %s436
          %s439 = ssub.s32 16, 16
          %440 = vsyncadd %s435, %s439
          %s441 = smul.addr %s37, 16
          %s442 = scalar_lea.hbm %s6, %s441
          %s444 = sshll.u32 %s437, 4
          %s445 = int_to_ptr.vmem [resolvable:$true] %s444
          %447 = dma.hbm_to_vmem [thread:$0]  %s442, 16, %s445, %s435
        $region48: #{tpu_custom_call.1} parent=19 // pred_fallthru
          _
      $region20: #{tpu_custom_call.1} parent=5 // pred_fallthru
        _
      %p448 = scmp.le.s32.totalorder 1, %s30
      %p449 = scmp.lt.s32.totalorder %s30, 9
      %p450 = pnand %p448, %p449
      %p451 = pneg %p450
      // Predicated region
      $region49: #{tpu_custom_call.1} parent=5 // pred_check
        _
      $region50: #{tpu_custom_call.1} parent=5 // pred_check_branch
        %453 = sbr.rel (%p450) target = $region52
      $region51: #{tpu_custom_call.1} parent=5 // pred_region
        %s454 = ssub.s32 %s30, 1
        %s455 = sand.u32 %s57, 1
        %s456 = scalar_lea.sflag [#allocation3], %s455
        %s457 = sand.u32 %s57, 1
        %s458 = smul.addr %s457, 32
        %s459 = scalar_lea.vmem [#allocation2], %s458
        // Predicated region
        $region53: #{tpu_custom_call.1} parent=51 // pred_check
          %p460 = pneg %p70
        $region54: #{tpu_custom_call.1} parent=51 // pred_check_branch
          %462 = sbr.rel (%p460) target = $region56
        $region55: #{tpu_custom_call.1} parent=51 // pred_region
          %463 = dma.done %s456, 512
        $region56: #{tpu_custom_call.1} parent=51 // pred_fallthru
          _
        %s464 = sand.u32 %s35, 1
        %s465 = scalar_lea.sflag [#allocation6], %s464
        %s466 = sand.u32 %s83, 1
        %s467 = smul.addr %s466, 256
        %s468 = scalar_lea.vmem [#allocation5], %s467
        // Predicated region
        $region57: #{tpu_custom_call.1} parent=51 // pred_check
          %p469 = pneg %p96
        $region58: #{tpu_custom_call.1} parent=51 // pred_check_branch
          %471 = sbr.rel (%p469) target = $region60
        $region59: #{tpu_custom_call.1} parent=51 // pred_region
          %472 = dma.done %s465, 4096
        $region60: #{tpu_custom_call.1} parent=51 // pred_fallthru
          _
        %s473 = sand.u32 %s35, 1
        %s474 = scalar_lea.sflag [#allocation6], %s473
        %s475 = sand.u32 %s109, 1
        %s476 = smul.addr %s475, 1536
        %s477 = scalar_lea.vmem [#allocation7], %s476
        // Predicated region
        $region61: #{tpu_custom_call.1} parent=51 // pred_check
          %p478 = pneg %p122
        $region62: #{tpu_custom_call.1} parent=51 // pred_check_branch
          %480 = sbr.rel (%p478) target = $region64
        $region63: #{tpu_custom_call.1} parent=51 // pred_region
          %481 = dma.done %s474, 24576
        $region64: #{tpu_custom_call.1} parent=51 // pred_fallthru
          _
        %s482 = sand.u32 %s35, 1
        %s483 = scalar_lea.sflag [#allocation9], %s482
        %s484 = sand.u32 %s135, 1
        %s485 = smul.addr %s484, 256
        %s486 = scalar_lea.vmem [#allocation8], %s485
        // Predicated region
        $region65: #{tpu_custom_call.1} parent=51 // pred_check
          %p487 = pneg %p148
        $region66: #{tpu_custom_call.1} parent=51 // pred_check_branch
          %489 = sbr.rel (%p487) target = $region68
        $region67: #{tpu_custom_call.1} parent=51 // pred_region
          %490 = dma.done %s483, 4096
        $region68: #{tpu_custom_call.1} parent=51 // pred_fallthru
          _
        %s491 = sand.u32 %s35, 1
        %s492 = scalar_lea.sflag [#allocation9], %s491
        %s493 = sand.u32 %s161, 1
        %s494 = smul.addr %s493, 2
        %s495 = scalar_lea.vmem [#allocation10], %s494
        // Predicated region
        $region69: #{tpu_custom_call.1} parent=51 // pred_check
          %p496 = pneg %p174
        $region70: #{tpu_custom_call.1} parent=51 // pred_check_branch
          %498 = sbr.rel (%p496) target = $region72
        $region71: #{tpu_custom_call.1} parent=51 // pred_region
          %499 = dma.done %s492, 32
        $region72: #{tpu_custom_call.1} parent=51 // pred_fallthru
          _
        %s500 = sand.u32 %s35, 1
        %s501 = scalar_lea.sflag [#allocation12], %s500
        %s502 = sand.u32 %s187, 1
        %s503 = smul.addr %s502, 2
        %s504 = scalar_lea.vmem [#allocation11], %s503
        // Predicated region
        $region73: #{tpu_custom_call.1} parent=51 // pred_check
          %p505 = pneg %p200
        $region74: #{tpu_custom_call.1} parent=51 // pred_check_branch
          %507 = sbr.rel (%p505) target = $region76
        $region75: #{tpu_custom_call.1} parent=51 // pred_region
          %508 = dma.done %s501, 32
        $region76: #{tpu_custom_call.1} parent=51 // pred_fallthru
          _
        %s509 = sand.u32 %s35, 1
        %s510 = scalar_lea.sflag [#allocation12], %s509
        %s511 = sand.u32 %s213, 1
        %s512 = scalar_lea.vmem [#allocation13], %s511
        // Predicated region
        $region77: #{tpu_custom_call.1} parent=51 // pred_check
          %p513 = pneg %p226
        $region78: #{tpu_custom_call.1} parent=51 // pred_check_branch
          %515 = sbr.rel (%p513) target = $region80
        $region79: #{tpu_custom_call.1} parent=51 // pred_region
          %516 = dma.done %s510, 16
        $region80: #{tpu_custom_call.1} parent=51 // pred_fallthru
          _
        // Predicated region
        $region81: #{tpu_custom_call.1} parent=51 // pred_check
          %p517 = pneg %p247
        $region82: #{tpu_custom_call.1} parent=51 // pred_check_branch
          %519 = sbr.rel (%p517) target = $region84
        $region83: #{tpu_custom_call.1} parent=51 // pred_region
          %520 = dma.done [#allocation15], 1536
        $region84: #{tpu_custom_call.1} parent=51 // pred_fallthru
          _
        %s521 = sand.u32 %s57, 1
        %s522 = scalar_lea.sflag [#allocation3], %s521
        %s523 = sand.u32 %s57, 1
        %s524 = smul.addr %s523, 32
        %s525 = scalar_lea.vmem [#allocation2], %s524
        %p526 = pneg %p70
        %p527 = pneg %p67
        %s528 = sand.u32 %s35, 1
        %s529 = scalar_lea.sflag [#allocation6], %s528
        %s530 = sand.u32 %s83, 1
        %s531 = smul.addr %s530, 256
        %s532 = scalar_lea.vmem [#allocation5], %s531
        %p533 = pneg %p96
        %p534 = pneg %p93
        %s535 = sand.u32 %s35, 1
        %s536 = scalar_lea.sflag [#allocation6], %s535
        %s537 = sand.u32 %s109, 1
        %s538 = smul.addr %s537, 1536
        %s539 = scalar_lea.vmem [#allocation7], %s538
        %p540 = pneg %p122
        %p541 = pneg %p119
        %s542 = sand.u32 %s35, 1
        %s543 = scalar_lea.sflag [#allocation9], %s542
        %s544 = sand.u32 %s135, 1
        %s545 = smul.addr %s544, 256
        %s546 = scalar_lea.vmem [#allocation8], %s545
        %p547 = pneg %p148
        %p548 = pneg %p145
        %s549 = sand.u32 %s35, 1
        %s550 = scalar_lea.sflag [#allocation9], %s549
        %s551 = sand.u32 %s161, 1
        %s552 = smul.addr %s551, 2
        %s553 = scalar_lea.vmem [#allocation10], %s552
        %p554 = pneg %p174
        %p555 = pneg %p171
        %s556 = sand.u32 %s35, 1
        %s557 = scalar_lea.sflag [#allocation12], %s556
        %s558 = sand.u32 %s187, 1
        %s559 = smul.addr %s558, 2
        %s560 = scalar_lea.vmem [#allocation11], %s559
        %p561 = pneg %p200
        %p562 = pneg %p197
        %s563 = sand.u32 %s35, 1
        %s564 = scalar_lea.sflag [#allocation12], %s563
        %s565 = sand.u32 %s213, 1
        %s566 = scalar_lea.vmem [#allocation13], %s565
        %p567 = pneg %p226
        %p568 = pneg %p223
        %p569 = pneg %p247
        %p570 = pneg %p244
        %p571 = pneg %p275
        %p572 = pneg %p272
        %s573 = sand.u32 %s262, 1
        %s574 = scalar_lea.sflag [#allocation4], %s573
        %s575 = sand.u32 %s262, 1
        %s576 = smul.addr %s575, 32
        %s577 = scalar_lea.vmem [#allocation16], %s576
        %s578 = smul.u32 4, %s40
        %s579 = smul.u32 4, %s40
        %v580 = vld [vmem:[%s459] sm:$0xff]
        %v581 = vld [vmem:[%s459 + $0x8] sm:$0xff]
        %v582 = vld [vmem:[%s459 + $0x10] sm:$0xff]
        %v583 = vld [vmem:[%s459 + $0x18] sm:$0xff]
        %v584 = vld [vmem:[%s468] sm:$0xff]
        %v585 = vld [vmem:[%s468 + $0x8] sm:$0xff]
        %v586 = vld [vmem:[%s468 + $0x10] sm:$0xff]
        %v587 = vld [vmem:[%s468 + $0x18] sm:$0xff]
        %v588 = vld [vmem:[%s468 + $0x20] sm:$0xff]
        %v589 = vld [vmem:[%s468 + $0x28] sm:$0xff]
        %v590 = vld [vmem:[%s468 + $0x30] sm:$0xff]
        %v591 = vld [vmem:[%s468 + $0x38] sm:$0xff]
        %v592 = vld [vmem:[%s468 + $0x40] sm:$0xff]
        %v593 = vld [vmem:[%s468 + $0x48] sm:$0xff]
        %v594 = vld [vmem:[%s468 + $0x50] sm:$0xff]
        %v595 = vld [vmem:[%s468 + $0x58] sm:$0xff]
        %v596 = vld [vmem:[%s468 + $0x60] sm:$0xff]
        %v597 = vld [vmem:[%s468 + $0x68] sm:$0xff]
        %v598 = vld [vmem:[%s468 + $0x70] sm:$0xff]
        %v599 = vld [vmem:[%s468 + $0x78] sm:$0xff]
        %v600 = vld [vmem:[%s468 + $0x80] sm:$0xff]
        %v601 = vld [vmem:[%s468 + $0x88] sm:$0xff]
        %v602 = vld [vmem:[%s468 + $0x90] sm:$0xff]
        %v603 = vld [vmem:[%s468 + $0x98] sm:$0xff]
        %v604 = vld [vmem:[%s468 + $0xa0] sm:$0xff]
        %v605 = vld [vmem:[%s468 + $0xa8] sm:$0xff]
        %v606 = vld [vmem:[%s468 + $0xb0] sm:$0xff]
        %v607 = vld [vmem:[%s468 + $0xb8] sm:$0xff]
        %v608 = vld [vmem:[%s468 + $0xc0] sm:$0xff]
        %v609 = vld [vmem:[%s468 + $0xc8] sm:$0xff]
        %v610 = vld [vmem:[%s468 + $0xd0] sm:$0xff]
        %v611 = vld [vmem:[%s468 + $0xd8] sm:$0xff]
        %v612 = vld [vmem:[%s468 + $0xe0] sm:$0xff]
        %v613 = vld [vmem:[%s468 + $0xe8] sm:$0xff]
        %v614 = vld [vmem:[%s468 + $0xf0] sm:$0xff]
        %v615 = vld [vmem:[%s468 + $0xf8] sm:$0xff]
        %v616 = vld [vmem:[%s495] sm:$0x3]
        %v618 = vlaneseq
        %v619 = vshrl.u32 %v618, 7
        %v620 = vsub.s32 0, %v619
        %v621 = vrot.slane %v616, %v620
        %v622 = vlaneseq
        %v623 = vshrl.u32 %v622, 7
        %v624 = vsub.s32 1, %v623
        %v625 = vrot.slane %v616, %v624
        %628 = vmatprep.subr.mxu0 %v615
        %629 = vmatpush1.msra.mxu0 %v614
        %630 = vmatprep.subr.mxu0 %v613
        %631 = vmatpush1.msra.mxu0 %v612
        %632 = vmatprep.subr.mxu0 %v611
        %633 = vmatpush1.msra.mxu0 %v610
        %634 = vmatprep.subr.mxu0 %v609
        %635 = vmatpush1.msra.mxu0 %v608
        %636 = vmatprep.subr.mxu0 %v607
        %637 = vmatpush1.msra.mxu0 %v606
        %638 = vmatprep.subr.mxu0 %v605
        %639 = vmatpush1.msra.mxu0 %v604
        %640 = vmatprep.subr.mxu0 %v603
        %641 = vmatpush1.msra.mxu0 %v602
        %642 = vmatprep.subr.mxu0 %v601
        %643 = vmatpush1.msra.mxu0 %v600
        %644 = vmatprep.subr.mxu0 %v599
        %645 = vmatpush1.msra.mxu0 %v598
        %646 = vmatprep.subr.mxu0 %v597
        %647 = vmatpush1.msra.mxu0 %v596
        %648 = vmatprep.subr.mxu0 %v595
        %649 = vmatpush1.msra.mxu0 %v594
        %650 = vmatprep.subr.mxu0 %v593
        %651 = vmatpush1.msra.mxu0 %v592
        %652 = vmatprep.subr.mxu0 %v591
        %653 = vmatpush1.msra.mxu0 %v590
        %654 = vmatprep.subr.mxu0 %v589
        %655 = vmatpush1.msra.mxu0 %v588
        %656 = vmatprep.subr.mxu0 %v587
        %657 = vmatpush1.msra.mxu0 %v586
        %658 = vmatprep.subr.mxu0 %v585
        %659 = vmatpush1.msra.mxu0 %v584
        %660 = vmatprep.subr.mxu0 0.0
        %661 = vmatpush2.msra.mxu0 0.0
        %662 = vmatprep.subr.mxu0 0.0
        %663 = vmatpush2.msra.mxu0 0.0
        %664 = vmatprep.subr.mxu0 0.0
        %665 = vmatpush2.msra.mxu0 0.0
        %666 = vmatprep.subr.mxu0 0.0
        %667 = vmatpush2.msra.mxu0 0.0
        %668 = vmatprep.subr.mxu0 0.0
        %669 = vmatpush2.msra.mxu0 0.0
        %670 = vmatprep.subr.mxu0 0.0
        %671 = vmatpush2.msra.mxu0 0.0
        %672 = vmatprep.subr.mxu0 0.0
        %673 = vmatpush2.msra.mxu0 0.0
        %674 = vmatprep.subr.mxu0 0.0
        %675 = vmatpush2.msra.mxu0 0.0
        %676 = vmatprep.subr.mxu0 0.0
        %677 = vmatpush2.msra.mxu0 0.0
        %678 = vmatprep.subr.mxu0 0.0
        %679 = vmatpush2.msra.mxu0 0.0
        %680 = vmatprep.subr.mxu0 0.0
        %681 = vmatpush2.msra.mxu0 0.0
        %682 = vmatprep.subr.mxu0 0.0
        %683 = vmatpush2.msra.mxu0 0.0
        %684 = vmatprep.subr.mxu0 0.0
        %685 = vmatpush2.msra.mxu0 0.0
        %686 = vmatprep.subr.mxu0 0.0
        %687 = vmatpush2.msra.mxu0 0.0
        %688 = vmatprep.subr.mxu0 0.0
        %689 = vmatpush2.msra.mxu0 0.0
        %690 = vmatprep.subr.mxu0 0.0
        %691 = vmatpush2.msra.mxu0 0.0
        %692 = vmatprep.mubr.f32.mxu0 0.0
        %693 = vmatmul.mubr.f32.gmra.mxu0 %v580
        %v694 = vpop.f32.mrf.mxu0
        %v695 = vadd.f32 %v621, %v694
        %v696 = vpop.f32.mrf.mxu0
        %v697 = vadd.f32 %v625, %v696
        %698 = vmatprep.mubr.f32.mxu0 0.0
        %699 = vmatmul.mubr.f32.gmra.mxu0 %v581
        %v700 = vpop.f32.mrf.mxu0
        %v701 = vadd.f32 %v621, %v700
        %v702 = vpop.f32.mrf.mxu0
        %v703 = vadd.f32 %v625, %v702
        %704 = vmatprep.mubr.f32.mxu0 0.0
        %705 = vmatmul.mubr.f32.gmra.mxu0 %v582
        %v706 = vpop.f32.mrf.mxu0
        %v707 = vadd.f32 %v621, %v706
        %v708 = vpop.f32.mrf.mxu0
        %v709 = vadd.f32 %v625, %v708
        %710 = vmatprep.mubr.f32.mxu0 0.0
        %711 = vmatmul.mubr.f32.gmra.mxu0 %v583
        %v712 = vpop.f32.mrf.mxu0
        %v713 = vadd.f32 %v621, %v712
        %v714 = vpop.f32.mrf.mxu0
        %v715 = vadd.f32 %v625, %v714
        %716 = vdwg.mxu0
        %v717 = vmax.f32 %v695, 0.0
        %v718 = vmax.f32 %v697, 0.0
        %v719 = vmax.f32 %v701, 0.0
        %v720 = vmax.f32 %v703, 0.0
        %v721 = vmax.f32 %v707, 0.0
        %v722 = vmax.f32 %v709, 0.0
        %v723 = vmax.f32 %v713, 0.0
        %v724 = vmax.f32 %v715, 0.0
        %v725 = vmin.f32 %v717, 6.0
        %v726 = vmin.f32 %v718, 6.0
        %v727 = vmin.f32 %v719, 6.0
        %v728 = vmin.f32 %v720, 6.0
        %v729 = vmin.f32 %v721, 6.0
        %v730 = vmin.f32 %v722, 6.0
        %v731 = vmin.f32 %v723, 6.0
        %v732 = vmin.f32 %v724, 6.0
        %v733 = vld [vmem:[%s504] sm:$0x3]
        %v734 = vld [vmem:[%s477] sm:$0xff]
        %v735 = vld [vmem:[%s477 + $0x8] sm:$0xff]
        %v736 = vld [vmem:[%s477 + $0x10] sm:$0xff]
        %v737 = vld [vmem:[%s477 + $0x18] sm:$0xff]
        %v738 = vld [vmem:[%s477 + $0x20] sm:$0xff]
        %v739 = vld [vmem:[%s477 + $0x28] sm:$0xff]
        %v740 = vld [vmem:[%s477 + $0x30] sm:$0xff]
        %v741 = vld [vmem:[%s477 + $0x38] sm:$0xff]
        %v742 = vld [vmem:[%s477 + $0x40] sm:$0xff]
        %v743 = vld [vmem:[%s477 + $0x48] sm:$0xff]
        %v744 = vld [vmem:[%s477 + $0x50] sm:$0xff]
        %v745 = vld [vmem:[%s477 + $0x58] sm:$0xff]
        %v746 = vld [vmem:[%s477 + $0x60] sm:$0xff]
        %v747 = vld [vmem:[%s477 + $0x68] sm:$0xff]
        %v748 = vld [vmem:[%s477 + $0x70] sm:$0xff]
        %v749 = vld [vmem:[%s477 + $0x78] sm:$0xff]
        %v750 = vld [vmem:[%s477 + $0x80] sm:$0xff]
        %v751 = vld [vmem:[%s477 + $0x88] sm:$0xff]
        %v752 = vld [vmem:[%s477 + $0x90] sm:$0xff]
        %v753 = vld [vmem:[%s477 + $0x98] sm:$0xff]
        %v754 = vld [vmem:[%s477 + $0xa0] sm:$0xff]
        %v755 = vld [vmem:[%s477 + $0xa8] sm:$0xff]
        %v756 = vld [vmem:[%s477 + $0xb0] sm:$0xff]
        %v757 = vld [vmem:[%s477 + $0xb8] sm:$0xff]
        %v758 = vld [vmem:[%s477 + $0xc0] sm:$0xff]
        %v759 = vld [vmem:[%s477 + $0xc8] sm:$0xff]
        %v760 = vld [vmem:[%s477 + $0xd0] sm:$0xff]
        %v761 = vld [vmem:[%s477 + $0xd8] sm:$0xff]
        %v762 = vld [vmem:[%s477 + $0xe0] sm:$0xff]
        %v763 = vld [vmem:[%s477 + $0xe8] sm:$0xff]
        %v764 = vld [vmem:[%s477 + $0xf0] sm:$0xff]
        %v765 = vld [vmem:[%s477 + $0xf8] sm:$0xff]
        %v766 = vld [vmem:[%s477 + $0x100] sm:$0xff]
        %v767 = vld [vmem:[%s477 + $0x108] sm:$0xff]
        %v768 = vld [vmem:[%s477 + $0x110] sm:$0xff]
        %v769 = vld [vmem:[%s477 + $0x118] sm:$0xff]
        %v770 = vld [vmem:[%s477 + $0x120] sm:$0xff]
        %v771 = vld [vmem:[%s477 + $0x128] sm:$0xff]
        %v772 = vld [vmem:[%s477 + $0x130] sm:$0xff]
        %v773 = vld [vmem:[%s477 + $0x138] sm:$0xff]
        %v774 = vld [vmem:[%s477 + $0x140] sm:$0xff]
        %v775 = vld [vmem:[%s477 + $0x148] sm:$0xff]
        %v776 = vld [vmem:[%s477 + $0x150] sm:$0xff]
        %v777 = vld [vmem:[%s477 + $0x158] sm:$0xff]
        %v778 = vld [vmem:[%s477 + $0x160] sm:$0xff]
        %v779 = vld [vmem:[%s477 + $0x168] sm:$0xff]
        %v780 = vld [vmem:[%s477 + $0x170] sm:$0xff]
        %v781 = vld [vmem:[%s477 + $0x178] sm:$0xff]
        %v782 = vld [vmem:[%s477 + $0x180] sm:$0xff]
        %v783 = vld [vmem:[%s477 + $0x188] sm:$0xff]
        %v784 = vld [vmem:[%s477 + $0x190] sm:$0xff]
        %v785 = vld [vmem:[%s477 + $0x198] sm:$0xff]
        %v786 = vld [vmem:[%s477 + $0x1a0] sm:$0xff]
        %v787 = vld [vmem:[%s477 + $0x1a8] sm:$0xff]
        %v788 = vld [vmem:[%s477 + $0x1b0] sm:$0xff]
        %v789 = vld [vmem:[%s477 + $0x1b8] sm:$0xff]
        %v790 = vld [vmem:[%s477 + $0x1c0] sm:$0xff]
        %v791 = vld [vmem:[%s477 + $0x1c8] sm:$0xff]
        %v792 = vld [vmem:[%s477 + $0x1d0] sm:$0xff]
        %v793 = vld [vmem:[%s477 + $0x1d8] sm:$0xff]
        %v794 = vld [vmem:[%s477 + $0x1e0] sm:$0xff]
        %v795 = vld [vmem:[%s477 + $0x1e8] sm:$0xff]
        %v796 = vld [vmem:[%s477 + $0x1f0] sm:$0xff]
        %v797 = vld [vmem:[%s477 + $0x1f8] sm:$0xff]
        %798 = vmatprep.subr.mxu0 %v765
        %799 = vmatpush1.msra.mxu0 %v764
        %800 = vmatprep.subr.mxu0 %v763
        %801 = vmatpush1.msra.mxu0 %v762
        %802 = vmatprep.subr.mxu0 %v761
        %803 = vmatpush1.msra.mxu0 %v760
        %804 = vmatprep.subr.mxu0 %v759
        %805 = vmatpush1.msra.mxu0 %v758
        %806 = vmatprep.subr.mxu0 %v757
        %807 = vmatpush1.msra.mxu0 %v756
        %808 = vmatprep.subr.mxu0 %v755
        %809 = vmatpush1.msra.mxu0 %v754
        %810 = vmatprep.subr.mxu0 %v753
        %811 = vmatpush1.msra.mxu0 %v752
        %812 = vmatprep.subr.mxu0 %v751
        %813 = vmatpush1.msra.mxu0 %v750
        %814 = vmatprep.subr.mxu0 %v749
        %815 = vmatpush1.msra.mxu0 %v748
        %816 = vmatprep.subr.mxu0 %v747
        %817 = vmatpush1.msra.mxu0 %v746
        %818 = vmatprep.subr.mxu0 %v745
        %819 = vmatpush1.msra.mxu0 %v744
        %820 = vmatprep.subr.mxu0 %v743
        %821 = vmatpush1.msra.mxu0 %v742
        %822 = vmatprep.subr.mxu0 %v741
        %823 = vmatpush1.msra.mxu0 %v740
        %824 = vmatprep.subr.mxu0 %v739
        %825 = vmatpush1.msra.mxu0 %v738
        %826 = vmatprep.subr.mxu0 %v737
        %827 = vmatpush1.msra.mxu0 %v736
        %828 = vmatprep.subr.mxu0 %v735
        %829 = vmatpush1.msra.mxu0 %v734
        %830 = vmatprep.subr.mxu0 %v797
        %831 = vmatpush2.msra.mxu0 %v796
        %832 = vmatprep.subr.mxu0 %v795
        %833 = vmatpush2.msra.mxu0 %v794
        %834 = vmatprep.subr.mxu0 %v793
        %835 = vmatpush2.msra.mxu0 %v792
        %836 = vmatprep.subr.mxu0 %v791
        %837 = vmatpush2.msra.mxu0 %v790
        %838 = vmatprep.subr.mxu0 %v789
        %839 = vmatpush2.msra.mxu0 %v788
        %840 = vmatprep.subr.mxu0 %v787
        %841 = vmatpush2.msra.mxu0 %v786
        %842 = vmatprep.subr.mxu0 %v785
        %843 = vmatpush2.msra.mxu0 %v784
        %844 = vmatprep.subr.mxu0 %v783
        %845 = vmatpush2.msra.mxu0 %v782
        %846 = vmatprep.subr.mxu0 %v781
        %847 = vmatpush2.msra.mxu0 %v780
        %848 = vmatprep.subr.mxu0 %v779
        %849 = vmatpush2.msra.mxu0 %v778
        %850 = vmatprep.subr.mxu0 %v777
        %851 = vmatpush2.msra.mxu0 %v776
        %852 = vmatprep.subr.mxu0 %v775
        %853 = vmatpush2.msra.mxu0 %v774
        %854 = vmatprep.subr.mxu0 %v773
        %855 = vmatpush2.msra.mxu0 %v772
        %856 = vmatprep.subr.mxu0 %v771
        %857 = vmatpush2.msra.mxu0 %v770
        %858 = vmatprep.subr.mxu0 %v769
        %859 = vmatpush2.msra.mxu0 %v768
        %860 = vmatprep.subr.mxu0 %v767
        %861 = vmatpush2.msra.mxu0 %v766
        %862 = vmatprep.mubr.f32.mxu0 %v726
        %863 = vmatmul.mubr.f32.gmra.mxu0 %v725
        %v864 = vpop.f32.mrf.mxu0
        %v865 = vadd.f32 0.0, %v864
        %v866 = vpop.f32.mrf.mxu0
        %v867 = vadd.f32 0.0, %v866
        %868 = vmatprep.mubr.f32.mxu0 %v728
        %869 = vmatmul.mubr.f32.gmra.mxu0 %v727
        %v870 = vpop.f32.mrf.mxu0
        %v871 = vadd.f32 0.0, %v870
        %v872 = vpop.f32.mrf.mxu0
        %v873 = vadd.f32 0.0, %v872
        %874 = vmatprep.mubr.f32.mxu0 %v730
        %875 = vmatmul.mubr.f32.gmra.mxu0 %v729
        %v876 = vpop.f32.mrf.mxu0
        %v877 = vadd.f32 0.0, %v876
        %v878 = vpop.f32.mrf.mxu0
        %v879 = vadd.f32 0.0, %v878
        %880 = vmatprep.mubr.f32.mxu0 %v732
        %881 = vmatmul.mubr.f32.gmra.mxu0 %v731
        %v882 = vpop.f32.mrf.mxu0
        %v883 = vadd.f32 0.0, %v882
        %v884 = vpop.f32.mrf.mxu0
        %v885 = vadd.f32 0.0, %v884
        %886 = vdwg.mxu0
        %s887 = scalar_lea.vmem %s477, 512 [#allocation7]
        %v888 = vld [vmem:[%s887] sm:$0xff]
        %v889 = vld [vmem:[%s887 + $0x8] sm:$0xff]
        %v890 = vld [vmem:[%s887 + $0x10] sm:$0xff]
        %v891 = vld [vmem:[%s887 + $0x18] sm:$0xff]
        %v892 = vld [vmem:[%s887 + $0x20] sm:$0xff]
        %v893 = vld [vmem:[%s887 + $0x28] sm:$0xff]
        %v894 = vld [vmem:[%s887 + $0x30] sm:$0xff]
        %v895 = vld [vmem:[%s887 + $0x38] sm:$0xff]
        %v896 = vld [vmem:[%s887 + $0x40] sm:$0xff]
        %v897 = vld [vmem:[%s887 + $0x48] sm:$0xff]
        %v898 = vld [vmem:[%s887 + $0x50] sm:$0xff]
        %v899 = vld [vmem:[%s887 + $0x58] sm:$0xff]
        %v900 = vld [vmem:[%s887 + $0x60] sm:$0xff]
        %v901 = vld [vmem:[%s887 + $0x68] sm:$0xff]
        %v902 = vld [vmem:[%s887 + $0x70] sm:$0xff]
        %v903 = vld [vmem:[%s887 + $0x78] sm:$0xff]
        %v904 = vld [vmem:[%s887 + $0x80] sm:$0xff]
        %v905 = vld [vmem:[%s887 + $0x88] sm:$0xff]
        %v906 = vld [vmem:[%s887 + $0x90] sm:$0xff]
        %v907 = vld [vmem:[%s887 + $0x98] sm:$0xff]
        %v908 = vld [vmem:[%s887 + $0xa0] sm:$0xff]
        %v909 = vld [vmem:[%s887 + $0xa8] sm:$0xff]
        %v910 = vld [vmem:[%s887 + $0xb0] sm:$0xff]
        %v911 = vld [vmem:[%s887 + $0xb8] sm:$0xff]
        %v912 = vld [vmem:[%s887 + $0xc0] sm:$0xff]
        %v913 = vld [vmem:[%s887 + $0xc8] sm:$0xff]
        %v914 = vld [vmem:[%s887 + $0xd0] sm:$0xff]
        %v915 = vld [vmem:[%s887 + $0xd8] sm:$0xff]
        %v916 = vld [vmem:[%s887 + $0xe0] sm:$0xff]
        %v917 = vld [vmem:[%s887 + $0xe8] sm:$0xff]
        %v918 = vld [vmem:[%s887 + $0xf0] sm:$0xff]
        %v919 = vld [vmem:[%s887 + $0xf8] sm:$0xff]
        %v920 = vld [vmem:[%s887 + $0x100] sm:$0xff]
        %v921 = vld [vmem:[%s887 + $0x108] sm:$0xff]
        %v922 = vld [vmem:[%s887 + $0x110] sm:$0xff]
        %v923 = vld [vmem:[%s887 + $0x118] sm:$0xff]
        %v924 = vld [vmem:[%s887 + $0x120] sm:$0xff]
        %v925 = vld [vmem:[%s887 + $0x128] sm:$0xff]
        %v926 = vld [vmem:[%s887 + $0x130] sm:$0xff]
        %v927 = vld [vmem:[%s887 + $0x138] sm:$0xff]
        %v928 = vld [vmem:[%s887 + $0x140] sm:$0xff]
        %v929 = vld [vmem:[%s887 + $0x148] sm:$0xff]
        %v930 = vld [vmem:[%s887 + $0x150] sm:$0xff]
        %v931 = vld [vmem:[%s887 + $0x158] sm:$0xff]
        %v932 = vld [vmem:[%s887 + $0x160] sm:$0xff]
        %v933 = vld [vmem:[%s887 + $0x168] sm:$0xff]
        %v934 = vld [vmem:[%s887 + $0x170] sm:$0xff]
        %v935 = vld [vmem:[%s887 + $0x178] sm:$0xff]
        %v936 = vld [vmem:[%s887 + $0x180] sm:$0xff]
        %v937 = vld [vmem:[%s887 + $0x188] sm:$0xff]
        %v938 = vld [vmem:[%s887 + $0x190] sm:$0xff]
        %v939 = vld [vmem:[%s887 + $0x198] sm:$0xff]
        %v940 = vld [vmem:[%s887 + $0x1a0] sm:$0xff]
        %v941 = vld [vmem:[%s887 + $0x1a8] sm:$0xff]
        %v942 = vld [vmem:[%s887 + $0x1b0] sm:$0xff]
        %v943 = vld [vmem:[%s887 + $0x1b8] sm:$0xff]
        %v944 = vld [vmem:[%s887 + $0x1c0] sm:$0xff]
        %v945 = vld [vmem:[%s887 + $0x1c8] sm:$0xff]
        %v946 = vld [vmem:[%s887 + $0x1d0] sm:$0xff]
        %v947 = vld [vmem:[%s887 + $0x1d8] sm:$0xff]
        %v948 = vld [vmem:[%s887 + $0x1e0] sm:$0xff]
        %v949 = vld [vmem:[%s887 + $0x1e8] sm:$0xff]
        %v950 = vld [vmem:[%s887 + $0x1f0] sm:$0xff]
        %v951 = vld [vmem:[%s887 + $0x1f8] sm:$0xff]
        %s952 = scalar_lea.vmem %s477, 1024 [#allocation7]
        %v953 = vld [vmem:[%s952] sm:$0xff]
        %v954 = vld [vmem:[%s952 + $0x8] sm:$0xff]
        %v955 = vld [vmem:[%s952 + $0x10] sm:$0xff]
        %v956 = vld [vmem:[%s952 + $0x18] sm:$0xff]
        %v957 = vld [vmem:[%s952 + $0x20] sm:$0xff]
        %v958 = vld [vmem:[%s952 + $0x28] sm:$0xff]
        %v959 = vld [vmem:[%s952 + $0x30] sm:$0xff]
        %v960 = vld [vmem:[%s952 + $0x38] sm:$0xff]
        %v961 = vld [vmem:[%s952 + $0x40] sm:$0xff]
        %v962 = vld [vmem:[%s952 + $0x48] sm:$0xff]
        %v963 = vld [vmem:[%s952 + $0x50] sm:$0xff]
        %v964 = vld [vmem:[%s952 + $0x58] sm:$0xff]
        %v965 = vld [vmem:[%s952 + $0x60] sm:$0xff]
        %v966 = vld [vmem:[%s952 + $0x68] sm:$0xff]
        %v967 = vld [vmem:[%s952 + $0x70] sm:$0xff]
        %v968 = vld [vmem:[%s952 + $0x78] sm:$0xff]
        %v969 = vld [vmem:[%s952 + $0x80] sm:$0xff]
        %v970 = vld [vmem:[%s952 + $0x88] sm:$0xff]
        %v971 = vld [vmem:[%s952 + $0x90] sm:$0xff]
        %v972 = vld [vmem:[%s952 + $0x98] sm:$0xff]
        %v973 = vld [vmem:[%s952 + $0xa0] sm:$0xff]
        %v974 = vld [vmem:[%s952 + $0xa8] sm:$0xff]
        %v975 = vld [vmem:[%s952 + $0xb0] sm:$0xff]
        %v976 = vld [vmem:[%s952 + $0xb8] sm:$0xff]
        %v977 = vld [vmem:[%s952 + $0xc0] sm:$0xff]
        %v978 = vld [vmem:[%s952 + $0xc8] sm:$0xff]
        %v979 = vld [vmem:[%s952 + $0xd0] sm:$0xff]
        %v980 = vld [vmem:[%s952 + $0xd8] sm:$0xff]
        %v981 = vld [vmem:[%s952 + $0xe0] sm:$0xff]
        %v982 = vld [vmem:[%s952 + $0xe8] sm:$0xff]
        %v983 = vld [vmem:[%s952 + $0xf0] sm:$0xff]
        %v984 = vld [vmem:[%s952 + $0xf8] sm:$0xff]
        %v985 = vld [vmem:[%s952 + $0x100] sm:$0xff]
        %v986 = vld [vmem:[%s952 + $0x108] sm:$0xff]
        %v987 = vld [vmem:[%s952 + $0x110] sm:$0xff]
        %v988 = vld [vmem:[%s952 + $0x118] sm:$0xff]
        %v989 = vld [vmem:[%s952 + $0x120] sm:$0xff]
        %v990 = vld [vmem:[%s952 + $0x128] sm:$0xff]
        %v991 = vld [vmem:[%s952 + $0x130] sm:$0xff]
        %v992 = vld [vmem:[%s952 + $0x138] sm:$0xff]
        %v993 = vld [vmem:[%s952 + $0x140] sm:$0xff]
        %v994 = vld [vmem:[%s952 + $0x148] sm:$0xff]
        %v995 = vld [vmem:[%s952 + $0x150] sm:$0xff]
        %v996 = vld [vmem:[%s952 + $0x158] sm:$0xff]
        %v997 = vld [vmem:[%s952 + $0x160] sm:$0xff]
        %v998 = vld [vmem:[%s952 + $0x168] sm:$0xff]
        %v999 = vld [vmem:[%s952 + $0x170] sm:$0xff]
        %v1000 = vld [vmem:[%s952 + $0x178] sm:$0xff]
        %v1001 = vld [vmem:[%s952 + $0x180] sm:$0xff]
        %v1002 = vld [vmem:[%s952 + $0x188] sm:$0xff]
        %v1003 = vld [vmem:[%s952 + $0x190] sm:$0xff]
        %v1004 = vld [vmem:[%s952 + $0x198] sm:$0xff]
        %v1005 = vld [vmem:[%s952 + $0x1a0] sm:$0xff]
        %v1006 = vld [vmem:[%s952 + $0x1a8] sm:$0xff]
        %v1007 = vld [vmem:[%s952 + $0x1b0] sm:$0xff]
        %v1008 = vld [vmem:[%s952 + $0x1b8] sm:$0xff]
        %v1009 = vld [vmem:[%s952 + $0x1c0] sm:$0xff]
        %v1010 = vld [vmem:[%s952 + $0x1c8] sm:$0xff]
        %v1011 = vld [vmem:[%s952 + $0x1d0] sm:$0xff]
        %v1012 = vld [vmem:[%s952 + $0x1d8] sm:$0xff]
        %v1013 = vld [vmem:[%s952 + $0x1e0] sm:$0xff]
        %v1014 = vld [vmem:[%s952 + $0x1e8] sm:$0xff]
        %v1015 = vld [vmem:[%s952 + $0x1f0] sm:$0xff]
        %v1016 = vld [vmem:[%s952 + $0x1f8] sm:$0xff]
        %1017 = vmatprep.subr.mxu0 %v984
        %1018 = vmatpush1.msra.mxu0 %v983
        %1019 = vmatprep.subr.mxu0 %v982
        %1020 = vmatpush1.msra.mxu0 %v981
        %1021 = vmatprep.subr.mxu0 %v980
        %1022 = vmatpush1.msra.mxu0 %v979
        %1023 = vmatprep.subr.mxu0 %v978
        %1024 = vmatpush1.msra.mxu0 %v977
        %1025 = vmatprep.subr.mxu0 %v976
        %1026 = vmatpush1.msra.mxu0 %v975
        %1027 = vmatprep.subr.mxu0 %v974
        %1028 = vmatpush1.msra.mxu0 %v973
        %1029 = vmatprep.subr.mxu0 %v972
        %1030 = vmatpush1.msra.mxu0 %v971
        %1031 = vmatprep.subr.mxu0 %v970
        %1032 = vmatpush1.msra.mxu0 %v969
        %1033 = vmatprep.subr.mxu0 %v968
        %1034 = vmatpush1.msra.mxu0 %v967
        %1035 = vmatprep.subr.mxu0 %v966
        %1036 = vmatpush1.msra.mxu0 %v965
        %1037 = vmatprep.subr.mxu0 %v964
        %1038 = vmatpush1.msra.mxu0 %v963
        %1039 = vmatprep.subr.mxu0 %v962
        %1040 = vmatpush1.msra.mxu0 %v961
        %1041 = vmatprep.subr.mxu0 %v960
        %1042 = vmatpush1.msra.mxu0 %v959
        %1043 = vmatprep.subr.mxu0 %v958
        %1044 = vmatpush1.msra.mxu0 %v957
        %1045 = vmatprep.subr.mxu0 %v956
        %1046 = vmatpush1.msra.mxu0 %v955
        %1047 = vmatprep.subr.mxu0 %v954
        %1048 = vmatpush1.msra.mxu0 %v953
        %1049 = vmatprep.subr.mxu0 %v1016
        %1050 = vmatpush2.msra.mxu0 %v1015
        %1051 = vmatprep.subr.mxu0 %v1014
        %1052 = vmatpush2.msra.mxu0 %v1013
        %1053 = vmatprep.subr.mxu0 %v1012
        %1054 = vmatpush2.msra.mxu0 %v1011
        %1055 = vmatprep.subr.mxu0 %v1010
        %1056 = vmatpush2.msra.mxu0 %v1009
        %1057 = vmatprep.subr.mxu0 %v1008
        %1058 = vmatpush2.msra.mxu0 %v1007
        %1059 = vmatprep.subr.mxu0 %v1006
        %1060 = vmatpush2.msra.mxu0 %v1005
        %1061 = vmatprep.subr.mxu0 %v1004
        %1062 = vmatpush2.msra.mxu0 %v1003
        %1063 = vmatprep.subr.mxu0 %v1002
        %1064 = vmatpush2.msra.mxu0 %v1001
        %1065 = vmatprep.subr.mxu0 %v1000
        %1066 = vmatpush2.msra.mxu0 %v999
        %1067 = vmatprep.subr.mxu0 %v998
        %1068 = vmatpush2.msra.mxu0 %v997
        %1069 = vmatprep.subr.mxu0 %v996
        %1070 = vmatpush2.msra.mxu0 %v995
        %1071 = vmatprep.subr.mxu0 %v994
        %1072 = vmatpush2.msra.mxu0 %v993
        %1073 = vmatprep.subr.mxu0 %v992
        %1074 = vmatpush2.msra.mxu0 %v991
        %1075 = vmatprep.subr.mxu0 %v990
        %1076 = vmatpush2.msra.mxu0 %v989
        %1077 = vmatprep.subr.mxu0 %v988
        %1078 = vmatpush2.msra.mxu0 %v987
        %1079 = vmatprep.subr.mxu0 %v986
        %1080 = vmatpush2.msra.mxu0 %v985
        %1081 = vmatprep.mubr.f32.mxu0 %v726
        %1082 = vmatmul.mubr.f32.gmra.mxu0 %v725
        %v1083 = vpop.f32.mrf.mxu0
        %v1084 = vadd.f32 0.0, %v1083
        %v1085 = vpop.f32.mrf.mxu0
        %v1086 = vadd.f32 0.0, %v1085
        %1087 = vmatprep.mubr.f32.mxu0 %v728
        %1088 = vmatmul.mubr.f32.gmra.mxu0 %v727
        %v1089 = vpop.f32.mrf.mxu0
        %v1090 = vadd.f32 0.0, %v1089
        %v1091 = vpop.f32.mrf.mxu0
        %v1092 = vadd.f32 0.0, %v1091
        %1093 = vmatprep.mubr.f32.mxu0 %v730
        %1094 = vmatmul.mubr.f32.gmra.mxu0 %v729
        %v1095 = vpop.f32.mrf.mxu0
        %v1096 = vadd.f32 0.0, %v1095
        %v1097 = vpop.f32.mrf.mxu0
        %v1098 = vadd.f32 0.0, %v1097
        %1099 = vmatprep.mubr.f32.mxu0 %v732
        %1100 = vmatmul.mubr.f32.gmra.mxu0 %v731
        %v1101 = vpop.f32.mrf.mxu0
        %v1102 = vadd.f32 0.0, %v1101
        %v1103 = vpop.f32.mrf.mxu0
        %v1104 = vadd.f32 0.0, %v1103
        %1105 = vdwg.mxu0
        %v1106 = vld [vmem:[#allocation14] sm:$0xff]
        %v1107 = vld [vmem:[#allocation14 + $0x8] sm:$0xff]
        %v1108 = vld [vmem:[#allocation14 + $0x10] sm:$0xff]
        %v1109 = vld [vmem:[#allocation14 + $0x18] sm:$0xff]
        %vm1110 = vcmask 261120
        %v1112 = vsel %vm1110, %v1106, 0
        %v1115 = vsel %vm1110, %v1107, 0
        %v1118 = vsel %vm1110, %v1108, 0
        %v1121 = vsel %vm1110, %v1109, 0
        %1123 = vmatprep.subr.mxu0 0.0
        %1124 = vmatpush1.msra.mxu0 0.0
        %1125 = vmatprep.subr.mxu0 0.0
        %1126 = vmatpush1.msra.mxu0 0.0
        %1127 = vmatprep.subr.mxu0 0.0
        %1128 = vmatpush1.msra.mxu0 0.0
        %1129 = vmatprep.subr.mxu0 0.0
        %1130 = vmatpush1.msra.mxu0 0.0
        %1131 = vmatprep.subr.mxu0 0.0
        %1132 = vmatpush1.msra.mxu0 0.0
        %1133 = vmatprep.subr.mxu0 0.0
        %1134 = vmatpush1.msra.mxu0 0.0
        %1135 = vmatprep.subr.mxu0 0.0
        %1136 = vmatpush1.msra.mxu0 0.0
        %1137 = vmatprep.subr.mxu0 0.0
        %1138 = vmatpush1.msra.mxu0 0.0
        %1139 = vmatprep.subr.mxu0 0.0
        %1140 = vmatpush1.msra.mxu0 0.0
        %1141 = vmatprep.subr.mxu0 0.0
        %1142 = vmatpush1.msra.mxu0 0.0
        %1143 = vmatprep.subr.mxu0 0.0
        %1144 = vmatpush1.msra.mxu0 0.0
        %1145 = vmatprep.subr.mxu0 0.0
        %1146 = vmatpush1.msra.mxu0 0.0
        %1147 = vmatprep.subr.mxu0 %v885
        %1148 = vmatpush1.msra.mxu0 %v883
        %1149 = vmatprep.subr.mxu0 %v879
        %1150 = vmatpush1.msra.mxu0 %v877
        %1151 = vmatprep.subr.mxu0 %v873
        %1152 = vmatpush1.msra.mxu0 %v871
        %1153 = vmatprep.subr.mxu0 %v867
        %1154 = vmatpush1.msra.mxu0 %v865
        %1155 = vmatprep.subr.mxu0 0.0
        %1156 = vmatpush2.msra.mxu0 0.0
        %1157 = vmatprep.subr.mxu0 0.0
        %1158 = vmatpush2.msra.mxu0 0.0
        %1159 = vmatprep.subr.mxu0 0.0
        %1160 = vmatpush2.msra.mxu0 0.0
        %1161 = vmatprep.subr.mxu0 0.0
        %1162 = vmatpush2.msra.mxu0 0.0
        %1163 = vmatprep.subr.mxu0 0.0
        %1164 = vmatpush2.msra.mxu0 0.0
        %1165 = vmatprep.subr.mxu0 0.0
        %1166 = vmatpush2.msra.mxu0 0.0
        %1167 = vmatprep.subr.mxu0 0.0
        %1168 = vmatpush2.msra.mxu0 0.0
        %1169 = vmatprep.subr.mxu0 0.0
        %1170 = vmatpush2.msra.mxu0 0.0
        %1171 = vmatprep.subr.mxu0 0.0
        %1172 = vmatpush2.msra.mxu0 0.0
        %1173 = vmatprep.subr.mxu0 0.0
        %1174 = vmatpush2.msra.mxu0 0.0
        %1175 = vmatprep.subr.mxu0 0.0
        %1176 = vmatpush2.msra.mxu0 0.0
        %1177 = vmatprep.subr.mxu0 0.0
        %1178 = vmatpush2.msra.mxu0 0.0
        %1179 = vmatprep.subr.mxu0 0.0
        %1180 = vmatpush2.msra.mxu0 0.0
        %1181 = vmatprep.subr.mxu0 0.0
        %1182 = vmatpush2.msra.mxu0 0.0
        %1183 = vmatprep.subr.mxu0 0.0
        %1184 = vmatpush2.msra.mxu0 0.0
        %1185 = vmatprep.subr.mxu0 0.0
        %1186 = vmatpush2.msra.mxu0 0.0
        %1187 = vmatprep.mubr.f32.mxu0 0.0
        %1188 = vmatmul.mubr.f32.gmra.mxu0 %v1112
        %v1189 = vpop.f32.mrf.mxu0
        %v1190 = vadd.f32 0.0, %v1189
        %v1191 = vpop.f32.mrf.mxu0
        %v1192 = vadd.f32 0.0, %v1191
        %1193 = vmatprep.mubr.f32.mxu0 0.0
        %1194 = vmatmul.mubr.f32.gmra.mxu0 %v1115
        %v1195 = vpop.f32.mrf.mxu0
        %v1196 = vadd.f32 0.0, %v1195
        %v1197 = vpop.f32.mrf.mxu0
        %v1198 = vadd.f32 0.0, %v1197
        %1199 = vmatprep.mubr.f32.mxu0 0.0
        %1200 = vmatmul.mubr.f32.gmra.mxu0 %v1118
        %v1201 = vpop.f32.mrf.mxu0
        %v1202 = vadd.f32 0.0, %v1201
        %v1203 = vpop.f32.mrf.mxu0
        %v1204 = vadd.f32 0.0, %v1203
        %1205 = vmatprep.mubr.f32.mxu0 0.0
        %1206 = vmatmul.mubr.f32.gmra.mxu0 %v1121
        %v1207 = vpop.f32.mrf.mxu0
        %v1208 = vadd.f32 0.0, %v1207
        %v1209 = vpop.f32.mrf.mxu0
        %v1210 = vadd.f32 0.0, %v1209
        %1211 = vdwg.mxu0
        %1212 = vmatprep.subr.mxu0 %v919
        %1213 = vmatpush1.msra.mxu0 %v918
        %1214 = vmatprep.subr.mxu0 %v917
        %1215 = vmatpush1.msra.mxu0 %v916
        %1216 = vmatprep.subr.mxu0 %v915
        %1217 = vmatpush1.msra.mxu0 %v914
        %1218 = vmatprep.subr.mxu0 %v913
        %1219 = vmatpush1.msra.mxu0 %v912
        %1220 = vmatprep.subr.mxu0 %v911
        %1221 = vmatpush1.msra.mxu0 %v910
        %1222 = vmatprep.subr.mxu0 %v909
        %1223 = vmatpush1.msra.mxu0 %v908
        %1224 = vmatprep.subr.mxu0 %v907
        %1225 = vmatpush1.msra.mxu0 %v906
        %1226 = vmatprep.subr.mxu0 %v905
        %1227 = vmatpush1.msra.mxu0 %v904
        %1228 = vmatprep.subr.mxu0 %v903
        %1229 = vmatpush1.msra.mxu0 %v902
        %1230 = vmatprep.subr.mxu0 %v901
        %1231 = vmatpush1.msra.mxu0 %v900
        %1232 = vmatprep.subr.mxu0 %v899
        %1233 = vmatpush1.msra.mxu0 %v898
        %1234 = vmatprep.subr.mxu0 %v897
        %1235 = vmatpush1.msra.mxu0 %v896
        %1236 = vmatprep.subr.mxu0 %v895
        %1237 = vmatpush1.msra.mxu0 %v894
        %1238 = vmatprep.subr.mxu0 %v893
        %1239 = vmatpush1.msra.mxu0 %v892
        %1240 = vmatprep.subr.mxu0 %v891
        %1241 = vmatpush1.msra.mxu0 %v890
        %1242 = vmatprep.subr.mxu0 %v889
        %1243 = vmatpush1.msra.mxu0 %v888
        %1244 = vmatprep.subr.mxu0 %v951
        %1245 = vmatpush2.msra.mxu0 %v950
        %1246 = vmatprep.subr.mxu0 %v949
        %1247 = vmatpush2.msra.mxu0 %v948
        %1248 = vmatprep.subr.mxu0 %v947
        %1249 = vmatpush2.msra.mxu0 %v946
        %1250 = vmatprep.subr.mxu0 %v945
        %1251 = vmatpush2.msra.mxu0 %v944
        %1252 = vmatprep.subr.mxu0 %v943
        %1253 = vmatpush2.msra.mxu0 %v942
        %1254 = vmatprep.subr.mxu0 %v941
        %1255 = vmatpush2.msra.mxu0 %v940
        %1256 = vmatprep.subr.mxu0 %v939
        %1257 = vmatpush2.msra.mxu0 %v938
        %1258 = vmatprep.subr.mxu0 %v937
        %1259 = vmatpush2.msra.mxu0 %v936
        %1260 = vmatprep.subr.mxu0 %v935
        %1261 = vmatpush2.msra.mxu0 %v934
        %1262 = vmatprep.subr.mxu0 %v933
        %1263 = vmatpush2.msra.mxu0 %v932
        %1264 = vmatprep.subr.mxu0 %v931
        %1265 = vmatpush2.msra.mxu0 %v930
        %1266 = vmatprep.subr.mxu0 %v929
        %1267 = vmatpush2.msra.mxu0 %v928
        %1268 = vmatprep.subr.mxu0 %v927
        %1269 = vmatpush2.msra.mxu0 %v926
        %1270 = vmatprep.subr.mxu0 %v925
        %1271 = vmatpush2.msra.mxu0 %v924
        %1272 = vmatprep.subr.mxu0 %v923
        %1273 = vmatpush2.msra.mxu0 %v922
        %1274 = vmatprep.subr.mxu0 %v921
        %1275 = vmatpush2.msra.mxu0 %v920
        %1276 = vmatprep.mubr.f32.mxu0 %v726
        %1277 = vmatmul.mubr.f32.gmra.mxu0 %v725
        %v1278 = vpop.f32.mrf.mxu0
        %v1279 = vadd.f32 %v1190, %v1278
        %v1280 = vpop.f32.mrf.mxu0
        %v1281 = vadd.f32 %v1192, %v1280
        %1282 = vmatprep.mubr.f32.mxu0 %v728
        %1283 = vmatmul.mubr.f32.gmra.mxu0 %v727
        %v1284 = vpop.f32.mrf.mxu0
        %v1285 = vadd.f32 %v1196, %v1284
        %v1286 = vpop.f32.mrf.mxu0
        %v1287 = vadd.f32 %v1198, %v1286
        %1288 = vmatprep.mubr.f32.mxu0 %v730
        %1289 = vmatmul.mubr.f32.gmra.mxu0 %v729
        %v1290 = vpop.f32.mrf.mxu0
        %v1291 = vadd.f32 %v1202, %v1290
        %v1292 = vpop.f32.mrf.mxu0
        %v1293 = vadd.f32 %v1204, %v1292
        %1294 = vmatprep.mubr.f32.mxu0 %v732
        %1295 = vmatmul.mubr.f32.gmra.mxu0 %v731
        %v1296 = vpop.f32.mrf.mxu0
        %v1297 = vadd.f32 %v1208, %v1296
        %v1298 = vpop.f32.mrf.mxu0
        %v1299 = vadd.f32 %v1210, %v1298
        %1300 = vdwg.mxu0
        %s1301 = scalar_lea.vmem [#allocation14], 64
        %v1302 = vld [vmem:[%s1301] sm:$0xff]
        %v1303 = vld [vmem:[%s1301 + $0x8] sm:$0xff]
        %v1304 = vld [vmem:[%s1301 + $0x10] sm:$0xff]
        %v1305 = vld [vmem:[%s1301 + $0x18] sm:$0xff]
        %v1307 = vsel %vm1110, %v1302, 0
        %v1310 = vsel %vm1110, %v1303, 0
        %v1313 = vsel %vm1110, %v1304, 0
        %v1316 = vsel %vm1110, %v1305, 0
        %1318 = vmatprep.subr.mxu0 0.0
        %1319 = vmatpush1.msra.mxu0 0.0
        %1320 = vmatprep.subr.mxu0 0.0
        %1321 = vmatpush1.msra.mxu0 0.0
        %1322 = vmatprep.subr.mxu0 0.0
        %1323 = vmatpush1.msra.mxu0 0.0
        %1324 = vmatprep.subr.mxu0 0.0
        %1325 = vmatpush1.msra.mxu0 0.0
        %1326 = vmatprep.subr.mxu0 0.0
        %1327 = vmatpush1.msra.mxu0 0.0
        %1328 = vmatprep.subr.mxu0 0.0
        %1329 = vmatpush1.msra.mxu0 0.0
        %1330 = vmatprep.subr.mxu0 0.0
        %1331 = vmatpush1.msra.mxu0 0.0
        %1332 = vmatprep.subr.mxu0 0.0
        %1333 = vmatpush1.msra.mxu0 0.0
        %1334 = vmatprep.subr.mxu0 0.0
        %1335 = vmatpush1.msra.mxu0 0.0
        %1336 = vmatprep.subr.mxu0 0.0
        %1337 = vmatpush1.msra.mxu0 0.0
        %1338 = vmatprep.subr.mxu0 0.0
        %1339 = vmatpush1.msra.mxu0 0.0
        %1340 = vmatprep.subr.mxu0 0.0
        %1341 = vmatpush1.msra.mxu0 0.0
        %1342 = vmatprep.subr.mxu0 %v1104
        %1343 = vmatpush1.msra.mxu0 %v1102
        %1344 = vmatprep.subr.mxu0 %v1098
        %1345 = vmatpush1.msra.mxu0 %v1096
        %1346 = vmatprep.subr.mxu0 %v1092
        %1347 = vmatpush1.msra.mxu0 %v1090
        %1348 = vmatprep.subr.mxu0 %v1086
        %1349 = vmatpush1.msra.mxu0 %v1084
        %1350 = vmatprep.subr.mxu0 0.0
        %1351 = vmatpush2.msra.mxu0 0.0
        %1352 = vmatprep.subr.mxu0 0.0
        %1353 = vmatpush2.msra.mxu0 0.0
        %1354 = vmatprep.subr.mxu0 0.0
        %1355 = vmatpush2.msra.mxu0 0.0
        %1356 = vmatprep.subr.mxu0 0.0
        %1357 = vmatpush2.msra.mxu0 0.0
        %1358 = vmatprep.subr.mxu0 0.0
        %1359 = vmatpush2.msra.mxu0 0.0
        %1360 = vmatprep.subr.mxu0 0.0
        %1361 = vmatpush2.msra.mxu0 0.0
        %1362 = vmatprep.subr.mxu0 0.0
        %1363 = vmatpush2.msra.mxu0 0.0
        %1364 = vmatprep.subr.mxu0 0.0
        %1365 = vmatpush2.msra.mxu0 0.0
        %1366 = vmatprep.subr.mxu0 0.0
        %1367 = vmatpush2.msra.mxu0 0.0
        %1368 = vmatprep.subr.mxu0 0.0
        %1369 = vmatpush2.msra.mxu0 0.0
        %1370 = vmatprep.subr.mxu0 0.0
        %1371 = vmatpush2.msra.mxu0 0.0
        %1372 = vmatprep.subr.mxu0 0.0
        %1373 = vmatpush2.msra.mxu0 0.0
        %1374 = vmatprep.subr.mxu0 0.0
        %1375 = vmatpush2.msra.mxu0 0.0
        %1376 = vmatprep.subr.mxu0 0.0
        %1377 = vmatpush2.msra.mxu0 0.0
        %1378 = vmatprep.subr.mxu0 0.0
        %1379 = vmatpush2.msra.mxu0 0.0
        %1380 = vmatprep.subr.mxu0 0.0
        %1381 = vmatpush2.msra.mxu0 0.0
        %1382 = vmatprep.mubr.f32.mxu0 0.0
        %1383 = vmatmul.mubr.f32.gmra.mxu0 %v1307
        %v1384 = vpop.f32.mrf.mxu0
        %v1385 = vadd.f32 0.0, %v1384
        %v1386 = vpop.f32.mrf.mxu0
        %v1387 = vadd.f32 0.0, %v1386
        %1388 = vmatprep.mubr.f32.mxu0 0.0
        %1389 = vmatmul.mubr.f32.gmra.mxu0 %v1310
        %v1390 = vpop.f32.mrf.mxu0
        %v1391 = vadd.f32 0.0, %v1390
        %v1392 = vpop.f32.mrf.mxu0
        %v1393 = vadd.f32 0.0, %v1392
        %1394 = vmatprep.mubr.f32.mxu0 0.0
        %1395 = vmatmul.mubr.f32.gmra.mxu0 %v1313
        %v1396 = vpop.f32.mrf.mxu0
        %v1397 = vadd.f32 0.0, %v1396
        %v1398 = vpop.f32.mrf.mxu0
        %v1399 = vadd.f32 0.0, %v1398
        %1400 = vmatprep.mubr.f32.mxu0 0.0
        %1401 = vmatmul.mubr.f32.gmra.mxu0 %v1316
        %v1402 = vpop.f32.mrf.mxu0
        %v1403 = vadd.f32 0.0, %v1402
        %v1404 = vpop.f32.mrf.mxu0
        %v1405 = vadd.f32 0.0, %v1404
        %1406 = vdwg.mxu0
        %v1407 = vadd.f32 %v1279, %v1385
        %v1408 = vadd.f32 %v1281, %v1387
        %v1409 = vadd.f32 %v1285, %v1391
        %v1410 = vadd.f32 %v1287, %v1393
        %v1411 = vadd.f32 %v1291, %v1397
        %v1412 = vadd.f32 %v1293, %v1399
        %v1413 = vadd.f32 %v1297, %v1403
        %v1414 = vadd.f32 %v1299, %v1405
        %v1416 = vlaneseq
        %v1417 = vshrl.u32 %v1416, 7
        %v1418 = vsub.s32 0, %v1417
        %v1419 = vrot.slane %v733, %v1418
        %v1420 = vlaneseq
        %v1421 = vshrl.u32 %v1420, 7
        %v1422 = vsub.s32 1, %v1421
        %v1423 = vrot.slane %v733, %v1422
        %v1426 = vadd.f32 %v1407, %v1419
        %v1427 = vadd.f32 %v1408, %v1423
        %v1428 = vadd.f32 %v1409, %v1419
        %v1429 = vadd.f32 %v1410, %v1423
        %v1430 = vadd.f32 %v1411, %v1419
        %v1431 = vadd.f32 %v1412, %v1423
        %v1432 = vadd.f32 %v1413, %v1419
        %v1433 = vadd.f32 %v1414, %v1423
        %v1434 = vmax.f32 %v1426, 0.0
        %v1435 = vmax.f32 %v1427, 0.0
        %v1436 = vmax.f32 %v1428, 0.0
        %v1437 = vmax.f32 %v1429, 0.0
        %v1438 = vmax.f32 %v1430, 0.0
        %v1439 = vmax.f32 %v1431, 0.0
        %v1440 = vmax.f32 %v1432, 0.0
        %v1441 = vmax.f32 %v1433, 0.0
        %v1442 = vmin.f32 %v1434, 6.0
        %v1443 = vmin.f32 %v1435, 6.0
        %v1444 = vmin.f32 %v1436, 6.0
        %v1445 = vmin.f32 %v1437, 6.0
        %v1446 = vmin.f32 %v1438, 6.0
        %v1447 = vmin.f32 %v1439, 6.0
        %v1448 = vmin.f32 %v1440, 6.0
        %v1449 = vmin.f32 %v1441, 6.0
        %v1450 = vld [vmem:[%s486] sm:$0xff]
        %v1451 = vld [vmem:[%s486 + $0x8] sm:$0xff]
        %v1452 = vld [vmem:[%s486 + $0x10] sm:$0xff]
        %v1453 = vld [vmem:[%s486 + $0x18] sm:$0xff]
        %v1454 = vld [vmem:[%s486 + $0x20] sm:$0xff]
        %v1455 = vld [vmem:[%s486 + $0x28] sm:$0xff]
        %v1456 = vld [vmem:[%s486 + $0x30] sm:$0xff]
        %v1457 = vld [vmem:[%s486 + $0x38] sm:$0xff]
        %v1458 = vld [vmem:[%s486 + $0x40] sm:$0xff]
        %v1459 = vld [vmem:[%s486 + $0x48] sm:$0xff]
        %v1460 = vld [vmem:[%s486 + $0x50] sm:$0xff]
        %v1461 = vld [vmem:[%s486 + $0x58] sm:$0xff]
        %v1462 = vld [vmem:[%s486 + $0x60] sm:$0xff]
        %v1463 = vld [vmem:[%s486 + $0x68] sm:$0xff]
        %v1464 = vld [vmem:[%s486 + $0x70] sm:$0xff]
        %v1465 = vld [vmem:[%s486 + $0x78] sm:$0xff]
        %v1466 = vld [vmem:[%s486 + $0x80] sm:$0xff]
        %v1467 = vld [vmem:[%s486 + $0x88] sm:$0xff]
        %v1468 = vld [vmem:[%s486 + $0x90] sm:$0xff]
        %v1469 = vld [vmem:[%s486 + $0x98] sm:$0xff]
        %v1470 = vld [vmem:[%s486 + $0xa0] sm:$0xff]
        %v1471 = vld [vmem:[%s486 + $0xa8] sm:$0xff]
        %v1472 = vld [vmem:[%s486 + $0xb0] sm:$0xff]
        %v1473 = vld [vmem:[%s486 + $0xb8] sm:$0xff]
        %v1474 = vld [vmem:[%s486 + $0xc0] sm:$0xff]
        %v1475 = vld [vmem:[%s486 + $0xc8] sm:$0xff]
        %v1476 = vld [vmem:[%s486 + $0xd0] sm:$0xff]
        %v1477 = vld [vmem:[%s486 + $0xd8] sm:$0xff]
        %v1478 = vld [vmem:[%s486 + $0xe0] sm:$0xff]
        %v1479 = vld [vmem:[%s486 + $0xe8] sm:$0xff]
        %v1480 = vld [vmem:[%s486 + $0xf0] sm:$0xff]
        %v1481 = vld [vmem:[%s486 + $0xf8] sm:$0xff]
        %v1482 = vld [vmem:[%s512] sm:$0x1]
        %v1484 = vlaneseq
        %v1485 = vshrl.u32 %v1484, 7
        %v1486 = vsub.s32 0, %v1485
        %v1487 = vrot.slane %v1482, %v1486
        %1489 = vmatprep.subr.mxu0 0.0
        %1490 = vmatpush1.msra.mxu0 %v1465
        %1491 = vmatprep.subr.mxu0 0.0
        %1492 = vmatpush1.msra.mxu0 %v1464
        %1493 = vmatprep.subr.mxu0 0.0
        %1494 = vmatpush1.msra.mxu0 %v1463
        %1495 = vmatprep.subr.mxu0 0.0
        %1496 = vmatpush1.msra.mxu0 %v1462
        %1497 = vmatprep.subr.mxu0 0.0
        %1498 = vmatpush1.msra.mxu0 %v1461
        %1499 = vmatprep.subr.mxu0 0.0
        %1500 = vmatpush1.msra.mxu0 %v1460
        %1501 = vmatprep.subr.mxu0 0.0
        %1502 = vmatpush1.msra.mxu0 %v1459
        %1503 = vmatprep.subr.mxu0 0.0
        %1504 = vmatpush1.msra.mxu0 %v1458
        %1505 = vmatprep.subr.mxu0 0.0
        %1506 = vmatpush1.msra.mxu0 %v1457
        %1507 = vmatprep.subr.mxu0 0.0
        %1508 = vmatpush1.msra.mxu0 %v1456
        %1509 = vmatprep.subr.mxu0 0.0
        %1510 = vmatpush1.msra.mxu0 %v1455
        %1511 = vmatprep.subr.mxu0 0.0
        %1512 = vmatpush1.msra.mxu0 %v1454
        %1513 = vmatprep.subr.mxu0 0.0
        %1514 = vmatpush1.msra.mxu0 %v1453
        %1515 = vmatprep.subr.mxu0 0.0
        %1516 = vmatpush1.msra.mxu0 %v1452
        %1517 = vmatprep.subr.mxu0 0.0
        %1518 = vmatpush1.msra.mxu0 %v1451
        %1519 = vmatprep.subr.mxu0 0.0
        %1520 = vmatpush1.msra.mxu0 %v1450
        %1521 = vmatprep.subr.mxu0 0.0
        %1522 = vmatpush2.msra.mxu0 %v1481
        %1523 = vmatprep.subr.mxu0 0.0
        %1524 = vmatpush2.msra.mxu0 %v1480
        %1525 = vmatprep.subr.mxu0 0.0
        %1526 = vmatpush2.msra.mxu0 %v1479
        %1527 = vmatprep.subr.mxu0 0.0
        %1528 = vmatpush2.msra.mxu0 %v1478
        %1529 = vmatprep.subr.mxu0 0.0
        %1530 = vmatpush2.msra.mxu0 %v1477
        %1531 = vmatprep.subr.mxu0 0.0
        %1532 = vmatpush2.msra.mxu0 %v1476
        %1533 = vmatprep.subr.mxu0 0.0
        %1534 = vmatpush2.msra.mxu0 %v1475
        %1535 = vmatprep.subr.mxu0 0.0
        %1536 = vmatpush2.msra.mxu0 %v1474
        %1537 = vmatprep.subr.mxu0 0.0
        %1538 = vmatpush2.msra.mxu0 %v1473
        %1539 = vmatprep.subr.mxu0 0.0
        %1540 = vmatpush2.msra.mxu0 %v1472
        %1541 = vmatprep.subr.mxu0 0.0
        %1542 = vmatpush2.msra.mxu0 %v1471
        %1543 = vmatprep.subr.mxu0 0.0
        %1544 = vmatpush2.msra.mxu0 %v1470
        %1545 = vmatprep.subr.mxu0 0.0
        %1546 = vmatpush2.msra.mxu0 %v1469
        %1547 = vmatprep.subr.mxu0 0.0
        %1548 = vmatpush2.msra.mxu0 %v1468
        %1549 = vmatprep.subr.mxu0 0.0
        %1550 = vmatpush2.msra.mxu0 %v1467
        %1551 = vmatprep.subr.mxu0 0.0
        %1552 = vmatpush2.msra.mxu0 %v1466
        %1553 = vmatprep.mubr.f32.mxu0 %v1443
        %1554 = vmatmul.mubr.f32.gmra.mxu0 %v1442
        %v1555 = vpop.f32.mrf.mxu0
        %v1556 = vadd.f32 %v1487, %v1555
        %v1557 = vpop.f32.mrf.mxu0
        %1558 = vmatprep.mubr.f32.mxu0 %v1445
        %1559 = vmatmul.mubr.f32.gmra.mxu0 %v1444
        %v1560 = vpop.f32.mrf.mxu0
        %v1561 = vadd.f32 %v1487, %v1560
        %v1562 = vpop.f32.mrf.mxu0
        %1563 = vmatprep.mubr.f32.mxu0 %v1447
        %1564 = vmatmul.mubr.f32.gmra.mxu0 %v1446
        %v1565 = vpop.f32.mrf.mxu0
        %v1566 = vadd.f32 %v1487, %v1565
        %v1567 = vpop.f32.mrf.mxu0
        %1568 = vmatprep.mubr.f32.mxu0 %v1449
        %1569 = vmatmul.mubr.f32.gmra.mxu0 %v1448
        %v1570 = vpop.f32.mrf.mxu0
        %v1571 = vadd.f32 %v1487, %v1570
        %v1572 = vpop.f32.mrf.mxu0
        %1573 = vdwg.mxu0
        %v1574 = vadd.f32 %v1556, %v580
        %v1575 = vadd.f32 %v1561, %v581
        %v1576 = vadd.f32 %v1566, %v582
        %v1577 = vadd.f32 %v1571, %v583
        %1578 = vst [vmem:[%s577] sm:$0xff] %v1574
        %1579 = vst [vmem:[%s577 + $0x8] sm:$0xff] %v1575
        %1580 = vst [vmem:[%s577 + $0x10] sm:$0xff] %v1576
        %1581 = vst [vmem:[%s577 + $0x18] sm:$0xff] %v1577
        %s1582 = sand.u32 %s262, 1
        %s1583 = scalar_lea.sflag [#allocation4], %s1582
        %s1584 = sand.u32 %s262, 1
        %s1585 = smul.addr %s1584, 32
        %s1586 = scalar_lea.vmem [#allocation16], %s1585
        // Predicated region
        $region85: #{tpu_custom_call.1} parent=51 // pred_check
          %p1587 = pneg %p272
        $region86: #{tpu_custom_call.1} parent=51 // pred_check_branch
          %1589 = sbr.rel (%p1587) target = $region88
        $region87: #{tpu_custom_call.1} parent=51 // pred_region
          %s1590 = smul.u32 4, %s40
          %s1592 = ssub.s32 512, 512
          %1593 = vsyncadd %s1583, %s1592
          %s1594 = smul.addr %s39, 16
          %s1595 = sadd.s32 %s1590, %s1594
          %s1596 = smul.addr %s1595, 128
          %s1597 = scalar_lea.hbm %s8, %s1596
          %s1598 = sshll.u32 %s1586, 4
          %s1599 = int_to_ptr.vmem [resolvable:$true] %s1598
          %1604 = dma.vmem_to_hbm [thread:$0]  %s1599, 512, %s1597, %s1583, 128, 128, 8
        $region88: #{tpu_custom_call.1} parent=51 // pred_fallthru
          _
      $region52: #{tpu_custom_call.1} parent=5 // pred_fallthru
        _
      %p1605 = scmp.le.s32.totalorder 2, %s30
      // Predicated region
      $region89: #{tpu_custom_call.1} parent=5 // pred_check
        %p1606 = pneg %p1605
      $region90: #{tpu_custom_call.1} parent=5 // pred_check_branch
        %1608 = sbr.rel (%p1606) target = $region92
      $region91: #{tpu_custom_call.1} parent=5 // pred_region
        %s1609 = ssub.s32 %s30, 2
        // Predicated region
        $region93: #{tpu_custom_call.1} parent=91 // pred_check
          %p1610 = pneg %p278
        $region94: #{tpu_custom_call.1} parent=91 // pred_check_branch
          %1612 = sbr.rel (%p1610) target = $region96
        $region95: #{tpu_custom_call.1} parent=91 // pred_region
          %s1613 = sand.u32 %s263, 1
          %s1614 = scalar_lea.sflag [#allocation4], %s1613
          %s1615 = sand.u32 %s263, 1
          %s1616 = smul.addr %s1615, 32
          %s1617 = scalar_lea.vmem [#allocation16], %s1616
          %1618 = dma.done %s1614, 512
        $region96: #{tpu_custom_call.1} parent=91 // pred_fallthru
          _
      $region92: #{tpu_custom_call.1} parent=5 // pred_fallthru
        _
    $region6: #{tpu_custom_call.1} parent=1 // loop_footer
      %s34 = sadd.s32 1, %s30
    $region7: #{tpu_custom_call.1} parent=1 // loop_footer_branch
      %29 = sbr.rel target = $region3
    $region8: #{tpu_custom_call.1} parent=1 // loop_exit
      _
    %1619 = vsyncpa [#allocation3], 1
    %s1620 = scalar_lea.sflag [#allocation3], 1
    %1621 = vsyncpa %s1620, 1
    %1622 = vsyncpa [#allocation6], 1
    %s1623 = scalar_lea.sflag [#allocation6], 1
    %1624 = vsyncpa %s1623, 1
    %1625 = vsyncpa [#allocation9], 1
    %s1626 = scalar_lea.sflag [#allocation9], 1
    %1627 = vsyncpa %s1626, 1
    %1628 = vsyncpa [#allocation12], 1
    %s1629 = scalar_lea.sflag [#allocation12], 1
    %1630 = vsyncpa %s1629, 1
    %1631 = vsyncpa [#allocation15], 1
    %1632 = vsyncpa [#allocation4], 1
    %s1633 = scalar_lea.sflag [#allocation4], 1
    %1634 = vsyncpa %s1633, 1

</llo_original>
